<compile_context>
chip_gen: v7x
topology: tpu7x:2x2x1
jax: 0.10.0
libtpu: 0.0.40
codegen_flags: <defaults>
</compile_context>

<pallas_src>
import functools
import math

import jax
import jax.numpy as jnp
from jax.experimental import pallas as pl
from jax.experimental.pallas import tpu as pltpu

UNITS = 32
PREDS = 1
LANE = 128          # lane width / minimum batch-tile granularity
CHUNK = 2048        # in-kernel compute chunk (multiple of LANE)
VMEM_LIMIT = 40 * 1024 * 1024   # safe on v5e/v6e (128 MiB phys) and v7x (64 MiB phys)


def _round_up(n, m):
    return ((n + m - 1) // m) * m


def _sigmoid(z):
    # Shared between kernel and reference so they match bit-for-bit-ish.
    return 1.0 / (1.0 + jnp.exp(-z))


def parnet_kernel(x_ref, w12_ref, b12_ref, w3_ref, b3_ref, o_ref, *, chunk, n_chunks):
    """One batch tile: x_ref (tile, 32) -> o_ref (1, tile) = sigmoid(mlp(x))."""
    w1 = w12_ref[0]            # (32, 32)  torch (out, in) layout
    w2 = w12_ref[1]            # (32, 32)
    b1 = b12_ref[0]            # (32, 1)
    b2 = b12_ref[1]            # (32, 1)
    w3 = w3_ref[...]           # (1, 32)
    b3 = b3_ref[...]           # (1, 1)
    hp = jax.lax.Precision.HIGHEST

    def body(c, carry):
        start = pl.multiple_of(c * chunk, LANE)
        # (chunk, 32) slice of the input block; cast keeps all math in f32
        # even if the caller fed bf16 x to halve HBM traffic.
        xc = x_ref[pl.ds(start, chunk), :].astype(jnp.float32)
        # Layer 1: relu(W1 @ xc^T + b1) -- transpose folded into the
        # contraction (contract dim 1 of both operands); result is (32, chunk)
        # with the batch on the 128-wide lane axis for the rest of the kernel.
        h = jax.lax.dot_general(
            w1, xc, dimension_numbers=(((1,), (1,)), ((), ())),
            preferred_element_type=jnp.float32, precision=hp)
        h = jnp.maximum(h + b1, 0.0)
        # Layer 2: relu(W2 @ h + b2)
        h = jnp.dot(w2, h, preferred_element_type=jnp.float32, precision=hp)
        h = jnp.maximum(h + b2, 0.0)
        # Layer 3 (out_features = 1) on the ~idle MXU: (1,32) @ (32,chunk).
        z = jnp.dot(w3, h, preferred_element_type=jnp.float32, precision=hp) + b3
        o_ref[:, pl.ds(start, chunk)] = _sigmoid(z).astype(o_ref.dtype)
        return carry

    jax.lax.fori_loop(0, n_chunks, body, 0)


def parnet_forward(x, params, *, tile_b=16384):
    """x: (B, UNITS) float32 (or bf16) -> (B,) float32, matches ParNet.forward."""
    w12, b12, w3, b3 = params
    B, U = x.shape
    assert U == UNITS

    # Tiny batches only: pad rows up to one lane width (<16 KiB copy) so a
    # block never exceeds the array extent.  Larger batches are never padded;
    # Pallas clamps the ragged last block's DMA and the garbage rows feed only
    # discarded output columns.
    if B < LANE:
        x_in = jnp.pad(x, ((0, LANE - B), (0, 0)))
        b_in = LANE
    else:
        x_in = x
        b_in = B

    # >= 2 grid steps when possible (megacore sharding), even step count so
    # both v7x TensorCores get balanced work, tiles a multiple of CHUNK so the
    # in-kernel loop is exact, and large enough to amortize ~0.35 us/step.
    n_steps = max(2, pl.cdiv(b_in, tile_b))
    n_steps += n_steps % 2
    tile = max(LANE, _round_up(pl.cdiv(b_in, n_steps), LANE))
    if tile > CHUNK:
        tile = _round_up(tile, CHUNK)
    chunk = tile if tile <= CHUNK else CHUNK
    grid = pl.cdiv(b_in, tile)
    b_out = grid * tile

    kernel = functools.partial(parnet_kernel, chunk=chunk, n_chunks=tile // chunk)

    out = pl.pallas_call(
        kernel,
        out_shape=jax.ShapeDtypeStruct((1, b_out), jnp.float32),
        grid_spec=pltpu.PrefetchScalarGridSpec(
            num_scalar_prefetch=0,
            grid=(grid,),
            in_specs=[
                pl.BlockSpec((tile, UNITS), lambda i: (i, 0)),          # x tile
                pl.BlockSpec((2, UNITS, UNITS), lambda i: (0, 0, 0)),   # W1, W2
                pl.BlockSpec((2, UNITS, 1), lambda i: (0, 0, 0)),       # b1, b2
                pl.BlockSpec((PREDS, UNITS), lambda i: (0, 0)),         # W3 (out,in)
                pl.BlockSpec((PREDS, PREDS), lambda i: (0, 0)),         # b3
            ],
            out_specs=pl.BlockSpec((1, tile), lambda i: (0, i)),
        ),
        compiler_params=pltpu.CompilerParams(
            dimension_semantics=("parallel",),
            vmem_limit_bytes=VMEM_LIMIT),
    )(x_in, w12, b12, w3, b3)

    # Row-0 selection == squeeze(dim=-1); slice drops any batch padding.
    return out[0, :B]


def init_params(key):
    """nn.Linear-style uniform init (bound = 1/sqrt(fan_in), fan_in = 32).

    Layers 1/2 stacked in torch (out, in) layout; layer 3 kept as (out, in) =
    (1, 32) and its bias as (1, 1).
    """
    k1, k2, k3, k4 = jax.random.split(key, 4)
    bound = 1.0 / math.sqrt(UNITS)
    w12 = jax.random.uniform(k1, (2, UNITS, UNITS), jnp.float32, -bound, bound)
    b12 = jax.random.uniform(k2, (2, UNITS, 1), jnp.float32, -bound, bound)
    w3 = jax.random.uniform(k3, (PREDS, UNITS), jnp.float32, -bound, bound)
    b3 = jax.random.uniform(k4, (PREDS, PREDS), jnp.float32, -bound, bound)
    return w12, b12, w3, b3


def parnet_reference(x, params):
    """Pure-JAX reference of the PyTorch forward (same param layout)."""
    w12, b12, w3, b3 = params
    hp = jax.lax.Precision.HIGHEST
    h = jnp.maximum(jnp.dot(x, w12[0].T, precision=hp) + b12[0, :, 0], 0.0)
    h = jnp.maximum(jnp.dot(h, w12[1].T, precision=hp) + b12[1, :, 0], 0.0)
    z = jnp.dot(h, w3.T, precision=hp) + b3[0]
    return _sigmoid(z)[:, 0]


if __name__ == "__main__":
    key = jax.random.PRNGKey(0)
    key, kx, kx2 = jax.random.split(key, 3)
    params = init_params(key)

    # Small batch (pads rows 16 -> 128, single tile).
    B = 16
    x = jax.random.normal(kx, (B, UNITS), jnp.float32)
    y = jax.block_until_ready(parnet_forward(x, params))
    y_ref = parnet_reference(x, params)
    assert y.shape == (B,)
    assert jnp.allclose(y, y_ref, atol=2e-5, rtol=2e-5)

    # Non-multiple batch exercising 2 grid steps + the ragged last block.
    B2 = 300
    x2 = jax.random.normal(kx2, (B2, UNITS), jnp.float32)
    y2 = jax.block_until_ready(parnet_forward(x2, params))
    y2_ref = parnet_reference(x2, params)
    assert y2.shape == (B2,)
    assert jnp.allclose(y2, y2_ref, atol=2e-5, rtol=2e-5)

    print("KERNEL_OK")
</pallas_src>

<mosaic_0001>
module attributes {stable_mosaic.version = 11 : i64} {
  func.func @parnet_kernel(%arg0: i32, %arg1: memref<128x32xf32, #tpu.memory_space<vmem>>, %arg2: memref<2x32x32xf32, #tpu.memory_space<vmem>>, %arg3: memref<2x32x1xf32, #tpu.memory_space<vmem>>, %arg4: memref<1x32xf32, #tpu.memory_space<vmem>>, %arg5: memref<1x1xf32, #tpu.memory_space<vmem>>, %arg6: memref<1x128xf32, #tpu.memory_space<vmem>>) attributes {dimension_semantics = [#tpu.dimension_semantics<parallel>], iteration_bounds = array<i64: 1>, scalar_prefetch = 0 : i64, scratch_operands = 0 : i64, tpu.core_type = #tpu.core_type<tc>, window_params = [{transform_indices = @transform_0, window_bounds = array<i64: 128, 32>}, {pipeline_mode = #tpu.pipeline_mode<synchronous>, transform_indices = @transform_1, window_bounds = array<i64: 2, 32, 32>}, {pipeline_mode = #tpu.pipeline_mode<synchronous>, transform_indices = @transform_2, window_bounds = array<i64: 2, 32, 1>}, {pipeline_mode = #tpu.pipeline_mode<synchronous>, transform_indices = @transform_3, window_bounds = array<i64: 1, 32>}, {pipeline_mode = #tpu.pipeline_mode<synchronous>, transform_indices = @transform_4, window_bounds = array<i64: 1, 1>}, {transform_indices = @transform_5, window_bounds = array<i64: 1, 128>}]} {
    %c0 = arith.constant 0 : index
    %c0_0 = arith.constant 0 : index
    %c0_1 = arith.constant 0 : index
    %0 = vector.load %arg2[%c0, %c0_0, %c0_1] : memref<2x32x32xf32, #tpu.memory_space<vmem>>, vector<1x32x32xf32>
    %1 = vector.shape_cast %0 : vector<1x32x32xf32> to vector<32x32xf32>
    %c1 = arith.constant 1 : index
    %c0_2 = arith.constant 0 : index
    %c0_3 = arith.constant 0 : index
    %2 = vector.load %arg2[%c1, %c0_2, %c0_3] : memref<2x32x32xf32, #tpu.memory_space<vmem>>, vector<1x32x32xf32>
    %3 = vector.shape_cast %2 : vector<1x32x32xf32> to vector<32x32xf32>
    %c0_4 = arith.constant 0 : index
    %c0_5 = arith.constant 0 : index
    %c0_6 = arith.constant 0 : index
    %4 = vector.load %arg3[%c0_4, %c0_5, %c0_6] : memref<2x32x1xf32, #tpu.memory_space<vmem>>, vector<1x32x1xf32>
    %5 = vector.shape_cast %4 : vector<1x32x1xf32> to vector<32x1xf32>
    %c1_7 = arith.constant 1 : index
    %c0_8 = arith.constant 0 : index
    %c0_9 = arith.constant 0 : index
    %6 = vector.load %arg3[%c1_7, %c0_8, %c0_9] : memref<2x32x1xf32, #tpu.memory_space<vmem>>, vector<1x32x1xf32>
    %7 = vector.shape_cast %6 : vector<1x32x1xf32> to vector<32x1xf32>
    %c0_10 = arith.constant 0 : index
    %c0_11 = arith.constant 0 : index
    %8 = vector.load %arg4[%c0_10, %c0_11] : memref<1x32xf32, #tpu.memory_space<vmem>>, vector<1x32xf32>
    %c0_12 = arith.constant 0 : index
    %c0_13 = arith.constant 0 : index
    %9 = vector.load %arg5[%c0_12, %c0_13] : memref<1x1xf32, #tpu.memory_space<vmem>>, vector<1x1xf32>
    %c0_i32 = arith.constant 0 : i32
    %c128_i32 = arith.constant 128 : i32
    %10 = arith.muli %c0_i32, %c128_i32 : i32
    %11 = tpu.assume_multiple %10, 128 : i32
    %12 = arith.index_cast %11 : i32 to index
    %c0_14 = arith.constant 0 : index
    %13 = vector.load %arg1[%12, %c0_14] : memref<128x32xf32, #tpu.memory_space<vmem>>, vector<128x32xf32>
    %cst = arith.constant dense<0.000000e+00> : vector<32x128xf32>
    %14 = tpu.matmul %1, %13, %cst {dimension_numbers = #tpu.dot_dimension_numbers<[1], [1], [0], [0], [0, 0, 1, 0], [], []>, precision = #tpu.contract_precision<fp32>} : vector<32x32xf32>, vector<128x32xf32>, vector<32x128xf32> -> vector<32x128xf32>
    %15 = vector.broadcast %5 : vector<32x1xf32> to vector<32x128xf32>
    %16 = arith.addf %14, %15 : vector<32x128xf32>
    %cst_15 = arith.constant 0.000000e+00 : f32
    %17 = vector.broadcast %cst_15 : f32 to vector<32x128xf32>
    %18 = arith.maximumf %16, %17 : vector<32x128xf32>
    %cst_16 = arith.constant dense<0.000000e+00> : vector<32x128xf32>
    %19 = tpu.matmul %3, %18, %cst_16 {dimension_numbers = #tpu.dot_dimension_numbers<[1], [0], [0], [1], [0, 0, 1, 1], [], []>, precision = #tpu.contract_precision<fp32>} : vector<32x32xf32>, vector<32x128xf32>, vector<32x128xf32> -> vector<32x128xf32>
    %20 = vector.broadcast %7 : vector<32x1xf32> to vector<32x128xf32>
    %21 = arith.addf %19, %20 : vector<32x128xf32>
    %cst_17 = arith.constant 0.000000e+00 : f32
    %22 = vector.broadcast %cst_17 : f32 to vector<32x128xf32>
    %23 = arith.maximumf %21, %22 : vector<32x128xf32>
    %cst_18 = arith.constant dense<0.000000e+00> : vector<1x128xf32>
    %24 = tpu.matmul %8, %23, %cst_18 {dimension_numbers = #tpu.dot_dimension_numbers<[1], [0], [0], [1], [0, 0, 1, 1], [], []>, precision = #tpu.contract_precision<fp32>} : vector<1x32xf32>, vector<32x128xf32>, vector<1x128xf32> -> vector<1x128xf32>
    %25 = vector.broadcast %9 : vector<1x1xf32> to vector<1x128xf32>
    %26 = arith.addf %24, %25 : vector<1x128xf32>
    %cst_19 = arith.constant 0.000000e+00 : f32
    %27 = vector.broadcast %cst_19 : f32 to vector<1x128xf32>
    %28 = arith.subf %27, %26 : vector<1x128xf32>
    %29 = math.exp %28 : vector<1x128xf32>
    %cst_20 = arith.constant 1.000000e+00 : f32
    %30 = vector.broadcast %cst_20 : f32 to vector<1x128xf32>
    %31 = arith.addf %30, %29 : vector<1x128xf32>
    %cst_21 = arith.constant 1.000000e+00 : f32
    %32 = vector.broadcast %cst_21 : f32 to vector<1x128xf32>
    %33 = arith.divf %32, %31 : vector<1x128xf32>
    %c0_22 = arith.constant 0 : index
    %34 = arith.index_cast %11 : i32 to index
    %35 = vector.load %arg6[%c0_22, %34] : memref<1x128xf32, #tpu.memory_space<vmem>>, vector<1x128xf32>
    tpu.vector_store %arg6[%c0_22, %34], %33 {strides = array<i32>} : memref<1x128xf32, #tpu.memory_space<vmem>>, vector<1x128xf32>,
    %c1_i32 = arith.constant 1 : i32
    return
  }
  func.func @transform_0(%arg0: i32) -> (i32, i32) {
    %c0_i32 = arith.constant 0 : i32
    %c0_i32_0 = arith.constant 0 : i32
    return %arg0, %c0_i32 : i32, i32
  }
  func.func @transform_1(%arg0: i32) -> (i32, i32, i32) {
    %c0_i32 = arith.constant 0 : i32
    %c0_i32_0 = arith.constant 0 : i32
    %c0_i32_1 = arith.constant 0 : i32
    %c0_i32_2 = arith.constant 0 : i32
    return %c0_i32, %c0_i32_0, %c0_i32_1 : i32, i32, i32
  }
  func.func @transform_2(%arg0: i32) -> (i32, i32, i32) {
    %c0_i32 = arith.constant 0 : i32
    %c0_i32_0 = arith.constant 0 : i32
    %c0_i32_1 = arith.constant 0 : i32
    %c0_i32_2 = arith.constant 0 : i32
    return %c0_i32, %c0_i32_0, %c0_i32_1 : i32, i32, i32
  }
  func.func @transform_3(%arg0: i32) -> (i32, i32) {
    %c0_i32 = arith.constant 0 : i32
    %c0_i32_0 = arith.constant 0 : i32
    %c0_i32_1 = arith.constant 0 : i32
    return %c0_i32, %c0_i32_0 : i32, i32
  }
  func.func @transform_4(%arg0: i32) -> (i32, i32) {
    %c0_i32 = arith.constant 0 : i32
    %c0_i32_0 = arith.constant 0 : i32
    %c0_i32_1 = arith.constant 0 : i32
    return %c0_i32, %c0_i32_0 : i32, i32
  }
  func.func @transform_5(%arg0: i32) -> (i32, i32) {
    %c0_i32 = arith.constant 0 : i32
    %c0_i32_0 = arith.constant 0 : i32
    return %c0_i32, %arg0 : i32, i32
  }
}

</mosaic_0001>

<llo_original>
// kernel: tpu_custom_call.1
$region0: #{tpu_custom_call.1}
  #allocation0 [shape = 'u32[]', space=smem, size = 0x4, offset = 0x4, fixed_abs, tag = 'smem constant byte address 0x4 - core index']
  #allocation1 [shape = 'u32[144,128]{1,0:T(1,128)}', space=vmem, size = 0x12000, scoped, tag = 'internal scratch']
  #allocation2 [shape = 'f32[1,1]{1,0:T(1,128)S(1)}', space=vmem, size = 0x200, scoped, tag = 'scoped memory for tpu_custom_call.1']
  %s0 = inlined_call_operand.vmem [shape: f32[128,32], index: 0, kind: input, shape index: {}]
  %s1 = inlined_call_operand.vmem [shape: f32[2,32,32], index: 1, kind: input, shape index: {}]
  %s2 = inlined_call_operand.vmem [shape: f32[2,32,1], index: 2, kind: input, shape index: {}]
  %s3 = inlined_call_operand.vmem [shape: f32[1,32], index: 3, kind: input, shape index: {}]
  %s4 = inlined_call_operand.<no memory space> [shape: f32[1,1], index: 4, kind: input, shape index: {}]
  %s5 = inlined_call_operand.hbm [shape: f32[1,128], index: 5, kind: output, shape index: {}]
  %s6 = sld [smem:[#allocation0]]
  $region30: #{tpu_custom_call.1} parent=0
    _
  %s8 = ssub.s32 1, %s6
  %s9 = scalar_select 0, %s8, %s6
  %v10 = vstv %s4
  %11 = vst [vmem:[#allocation2] sm:$0x1] %v10
  $region1: #{tpu_custom_call.1} parent=0
    #allocation3 [shape = 'u8[512]{0}', space=vmem, size = 0x400, scoped, tag = 'output window, operand 0, single buffered']
    #allocation4 [shape = 's32[1]{0}', space=sflag, size = 0x4, scoped, tag = 'scoped memory for tpu_custom_call.1']
    %12 = vsyncpa [#allocation4], 0
    // Predicated region
    $region2: #{tpu_custom_call.1} parent=1 // pred_check
      _
    $region3: #{tpu_custom_call.1} parent=1 // pred_check_branch
      %14 = sbr.rel (0) target = $region5
    $region4: #{tpu_custom_call.1} parent=1 // pred_region
      _
    $region5: #{tpu_custom_call.1} parent=1 // pred_fallthru
      _
    // Predicated region
    $region6: #{tpu_custom_call.1} parent=1 // pred_check
      _
    $region7: #{tpu_custom_call.1} parent=1 // pred_check_branch
      %16 = sbr.rel (0) target = $region9
    $region8: #{tpu_custom_call.1} parent=1 // pred_region
      _
    $region9: #{tpu_custom_call.1} parent=1 // pred_fallthru
      _
    // Predicated region
    $region10: #{tpu_custom_call.1} parent=1 // pred_check
      _
    $region11: #{tpu_custom_call.1} parent=1 // pred_check_branch
      %18 = sbr.rel (0) target = $region13
    $region12: #{tpu_custom_call.1} parent=1 // pred_region
      _
    $region13: #{tpu_custom_call.1} parent=1 // pred_fallthru
      _
    // Predicated region
    $region14: #{tpu_custom_call.1} parent=1 // pred_check
      _
    $region15: #{tpu_custom_call.1} parent=1 // pred_check_branch
      %20 = sbr.rel (0) target = $region17
    $region16: #{tpu_custom_call.1} parent=1 // pred_region
      _
    $region17: #{tpu_custom_call.1} parent=1 // pred_fallthru
      _
    // Predicated region
    $region18: #{tpu_custom_call.1} parent=1 // pred_check
      _
    $region19: #{tpu_custom_call.1} parent=1 // pred_check_branch
      %22 = sbr.rel (0) target = $region21
    $region20: #{tpu_custom_call.1} parent=1 // pred_region
      _
    $region21: #{tpu_custom_call.1} parent=1 // pred_fallthru
      _
    %v23 = vld [vmem:[%s1] sm:$0xff]
    %v24 = vld [vmem:[%s1 + $0x8] sm:$0xff]
    %v25 = vld [vmem:[%s1 + $0x10] sm:$0xff]
    %v26 = vld [vmem:[%s1 + $0x18] sm:$0xff]
    %s27 = scalar_lea.vmem %s1, 32
    %v28 = vld [vmem:[%s27] sm:$0xff]
    %v29 = vld [vmem:[%s27 + $0x8] sm:$0xff]
    %v30 = vld [vmem:[%s27 + $0x10] sm:$0xff]
    %v31 = vld [vmem:[%s27 + $0x18] sm:$0xff]
    %v32 = vld [vmem:[%s2] sm:$0xff]
    %v33 = vld [vmem:[%s2 + $0x8] sm:$0xff]
    %v34 = vld [vmem:[%s2 + $0x10] sm:$0xff]
    %v35 = vld [vmem:[%s2 + $0x18] sm:$0xff]
    %s36 = scalar_lea.vmem %s2, 32
    %v37 = vld [vmem:[%s36] sm:$0xff]
    %v38 = vld [vmem:[%s36 + $0x8] sm:$0xff]
    %v39 = vld [vmem:[%s36 + $0x10] sm:$0xff]
    %v40 = vld [vmem:[%s36 + $0x18] sm:$0xff]
    %v41 = vld [vmem:[%s3] sm:$0x1]
    %v42 = vld [vmem:[#allocation2] sm:$0x1]
    %v43 = vld [vmem:[%s0] sm:$0xff]
    %v44 = vld [vmem:[%s0 + $0x8] sm:$0xff]
    %v45 = vld [vmem:[%s0 + $0x10] sm:$0xff]
    %v46 = vld [vmem:[%s0 + $0x18] sm:$0xff]
    %v47 = vld [vmem:[%s0 + $0x20] sm:$0xff]
    %v48 = vld [vmem:[%s0 + $0x28] sm:$0xff]
    %v49 = vld [vmem:[%s0 + $0x30] sm:$0xff]
    %v50 = vld [vmem:[%s0 + $0x38] sm:$0xff]
    %v51 = vld [vmem:[%s0 + $0x40] sm:$0xff]
    %v52 = vld [vmem:[%s0 + $0x48] sm:$0xff]
    %v53 = vld [vmem:[%s0 + $0x50] sm:$0xff]
    %v54 = vld [vmem:[%s0 + $0x58] sm:$0xff]
    %v55 = vld [vmem:[%s0 + $0x60] sm:$0xff]
    %v56 = vld [vmem:[%s0 + $0x68] sm:$0xff]
    %v57 = vld [vmem:[%s0 + $0x70] sm:$0xff]
    %v58 = vld [vmem:[%s0 + $0x78] sm:$0xff]
    %60 = vset.pattern.permute.xlu0 0
    %61 = vperm.xlu0 %60, %v32
    %v62 = vpop.permute.xlu0 %61
    %65 = vset.pattern.permute.xlu0 0
    %66 = vperm.xlu0 %65, %v33
    %v67 = vpop.permute.xlu0 %66
    %70 = vset.pattern.permute.xlu0 0
    %71 = vperm.xlu0 %70, %v34
    %v72 = vpop.permute.xlu0 %71
    %75 = vset.pattern.permute.xlu0 0
    %76 = vperm.xlu0 %75, %v35
    %v77 = vpop.permute.xlu0 %76
    %vm79 = vcmask 261120
    %v81 = vsel %vm79, %v23, 0
    %v84 = vsel %vm79, %v24, 0
    %v87 = vsel %vm79, %v25, 0
    %v90 = vsel %vm79, %v26, 0
    %v93 = vsel %vm79, %v43, 0
    %v96 = vsel %vm79, %v44, 0
    %v99 = vsel %vm79, %v45, 0
    %v102 = vsel %vm79, %v46, 0
    %v105 = vsel %vm79, %v47, 0
    %v108 = vsel %vm79, %v48, 0
    %v111 = vsel %vm79, %v49, 0
    %v114 = vsel %vm79, %v50, 0
    %v117 = vsel %vm79, %v51, 0
    %v120 = vsel %vm79, %v52, 0
    %v123 = vsel %vm79, %v53, 0
    %v126 = vsel %vm79, %v54, 0
    %v129 = vsel %vm79, %v55, 0
    %v132 = vsel %vm79, %v56, 0
    %v135 = vsel %vm79, %v57, 0
    %v138 = vsel %vm79, %v58, 0
    %140 = vmatprep.subr.mxu0 0.0
    %v141 = vand.u32 %v93, 4294901760
    %142 = vmatpush1.xpose.msra.mxu0 %v141
    %143 = vmatprep.subr.mxu0 0.0
    %v144 = vand.u32 %v96, 4294901760
    %145 = vmatpush1.xpose.msra.mxu0 %v144
    %146 = vmatprep.subr.mxu0 0.0
    %v147 = vand.u32 %v99, 4294901760
    %148 = vmatpush1.xpose.msra.mxu0 %v147
    %149 = vmatprep.subr.mxu0 0.0
    %v150 = vand.u32 %v102, 4294901760
    %151 = vmatpush1.xpose.msra.mxu0 %v150
    %152 = vmatprep.subr.mxu0 0.0
    %v153 = vand.u32 %v105, 4294901760
    %154 = vmatpush1.xpose.msra.mxu0 %v153
    %155 = vmatprep.subr.mxu0 0.0
    %v156 = vand.u32 %v108, 4294901760
    %157 = vmatpush1.xpose.msra.mxu0 %v156
    %158 = vmatprep.subr.mxu0 0.0
    %v159 = vand.u32 %v111, 4294901760
    %160 = vmatpush1.xpose.msra.mxu0 %v159
    %161 = vmatprep.subr.mxu0 0.0
    %v162 = vand.u32 %v114, 4294901760
    %163 = vmatpush1.xpose.msra.mxu0 %v162
    %164 = vmatprep.subr.mxu0 0.0
    %v165 = vand.u32 %v117, 4294901760
    %166 = vmatpush1.xpose.msra.mxu0 %v165
    %167 = vmatprep.subr.mxu0 0.0
    %v168 = vand.u32 %v120, 4294901760
    %169 = vmatpush1.xpose.msra.mxu0 %v168
    %170 = vmatprep.subr.mxu0 0.0
    %v171 = vand.u32 %v123, 4294901760
    %172 = vmatpush1.xpose.msra.mxu0 %v171
    %173 = vmatprep.subr.mxu0 0.0
    %v174 = vand.u32 %v126, 4294901760
    %175 = vmatpush1.xpose.msra.mxu0 %v174
    %176 = vmatprep.subr.mxu0 0.0
    %v177 = vand.u32 %v129, 4294901760
    %178 = vmatpush1.xpose.msra.mxu0 %v177
    %179 = vmatprep.subr.mxu0 0.0
    %v180 = vand.u32 %v132, 4294901760
    %181 = vmatpush1.xpose.msra.mxu0 %v180
    %182 = vmatprep.subr.mxu0 0.0
    %v183 = vand.u32 %v135, 4294901760
    %184 = vmatpush1.xpose.msra.mxu0 %v183
    %185 = vmatprep.subr.mxu0 0.0
    %v186 = vand.u32 %v138, 4294901760
    %187 = vmatpush1.xpose.msra.mxu0 %v186
    %188 = vmatprep.subr.mxu0 0.0
    %189 = vmatpush1.xpose.msra.mxu0 0.0
    %190 = vmatprep.subr.mxu0 0.0
    %191 = vmatpush1.xpose.msra.mxu0 0.0
    %192 = vmatprep.subr.mxu0 0.0
    %193 = vmatpush1.xpose.msra.mxu0 0.0
    %194 = vmatprep.subr.mxu0 0.0
    %195 = vmatpush1.xpose.msra.mxu0 0.0
    %196 = vmatprep.subr.mxu0 0.0
    %197 = vmatpush1.xpose.msra.mxu0 0.0
    %198 = vmatprep.subr.mxu0 0.0
    %199 = vmatpush1.xpose.msra.mxu0 0.0
    %200 = vmatprep.subr.mxu0 0.0
    %201 = vmatpush1.xpose.msra.mxu0 0.0
    %202 = vmatprep.subr.mxu0 0.0
    %203 = vmatpush1.xpose.msra.mxu0 0.0
    %204 = vmatprep.subr.mxu0 0.0
    %205 = vmatpush1.xpose.msra.mxu0 0.0
    %206 = vmatprep.subr.mxu0 0.0
    %207 = vmatpush1.xpose.msra.mxu0 0.0
    %208 = vmatprep.subr.mxu0 0.0
    %209 = vmatpush1.xpose.msra.mxu0 0.0
    %210 = vmatprep.subr.mxu0 0.0
    %211 = vmatpush1.xpose.msra.mxu0 0.0
    %212 = vmatprep.subr.mxu0 0.0
    %213 = vmatpush1.xpose.msra.mxu0 0.0
    %214 = vmatprep.subr.mxu0 0.0
    %215 = vmatpush1.xpose.msra.mxu0 0.0
    %216 = vmatprep.subr.mxu0 0.0
    %217 = vmatpush1.xpose.msra.mxu0 0.0
    %218 = vmatprep.subr.mxu0 0.0
    %219 = vmatpush1.xpose.msra.mxu0 0.0
    %220 = vmatprep.mubr.f32.mxu0 0.0
    %v221 = vand.u32 %v81, 4294901760
    %v222 = vsub.f32 %v81, %v221
    %v223 = vand.u32 %v222, 4294901760
    %v224 = vsub.f32 %v222, %v223
    %v225 = vand.u32 %v224, 4294901760
    %226 = vmatmul.mubr.f32.gmra.mrb[0].mxu0 %v225
    %v227 = vpop.f32.mrb[0].mxu0
    %v228 = vadd.f32 %v62, %v227
    %v229 = vpop.f32.mrb[0].mxu0
    %230 = vmatprep.mubr.f32.mxu0 0.0
    %v231 = vand.u32 %v84, 4294901760
    %v232 = vsub.f32 %v84, %v231
    %v233 = vand.u32 %v232, 4294901760
    %v234 = vsub.f32 %v232, %v233
    %v235 = vand.u32 %v234, 4294901760
    %236 = vmatmul.mubr.f32.gmra.mrb[0].mxu0 %v235
    %v237 = vpop.f32.mrb[0].mxu0
    %v238 = vadd.f32 %v67, %v237
    %v239 = vpop.f32.mrb[0].mxu0
    %240 = vmatprep.mubr.f32.mxu0 0.0
    %v241 = vand.u32 %v87, 4294901760
    %v242 = vsub.f32 %v87, %v241
    %v243 = vand.u32 %v242, 4294901760
    %v244 = vsub.f32 %v242, %v243
    %v245 = vand.u32 %v244, 4294901760
    %246 = vmatmul.mubr.f32.gmra.mrb[0].mxu0 %v245
    %v247 = vpop.f32.mrb[0].mxu0
    %v248 = vadd.f32 %v72, %v247
    %v249 = vpop.f32.mrb[0].mxu0
    %250 = vmatprep.mubr.f32.mxu0 0.0
    %v251 = vand.u32 %v90, 4294901760
    %v252 = vsub.f32 %v90, %v251
    %v253 = vand.u32 %v252, 4294901760
    %v254 = vsub.f32 %v252, %v253
    %v255 = vand.u32 %v254, 4294901760
    %256 = vmatmul.mubr.f32.gmra.mrb[0].mxu0 %v255
    %v257 = vpop.f32.mrb[0].mxu0
    %v258 = vadd.f32 %v77, %v257
    %v259 = vpop.f32.mrb[0].mxu0
    %260 = vdwg.mxu0
    %261 = vmatprep.subr.mxu0 0.0
    %v262 = vand.u32 %v93, 4294901760
    %v263 = vsub.f32 %v93, %v262
    %v264 = vand.u32 %v263, 4294901760
    %v265 = vsub.f32 %v263, %v264
    %v266 = vand.u32 %v265, 4294901760
    %267 = vmatpush1.xpose.msra.mxu0 %v266
    %268 = vmatprep.subr.mxu0 0.0
    %v269 = vand.u32 %v96, 4294901760
    %v270 = vsub.f32 %v96, %v269
    %v271 = vand.u32 %v270, 4294901760
    %v272 = vsub.f32 %v270, %v271
    %v273 = vand.u32 %v272, 4294901760
    %274 = vmatpush1.xpose.msra.mxu0 %v273
    %275 = vmatprep.subr.mxu0 0.0
    %v276 = vand.u32 %v99, 4294901760
    %v277 = vsub.f32 %v99, %v276
    %v278 = vand.u32 %v277, 4294901760
    %v279 = vsub.f32 %v277, %v278
    %v280 = vand.u32 %v279, 4294901760
    %281 = vmatpush1.xpose.msra.mxu0 %v280
    %282 = vmatprep.subr.mxu0 0.0
    %v283 = vand.u32 %v102, 4294901760
    %v284 = vsub.f32 %v102, %v283
    %v285 = vand.u32 %v284, 4294901760
    %v286 = vsub.f32 %v284, %v285
    %v287 = vand.u32 %v286, 4294901760
    %288 = vmatpush1.xpose.msra.mxu0 %v287
    %289 = vmatprep.subr.mxu0 0.0
    %v290 = vand.u32 %v105, 4294901760
    %v291 = vsub.f32 %v105, %v290
    %v292 = vand.u32 %v291, 4294901760
    %v293 = vsub.f32 %v291, %v292
    %v294 = vand.u32 %v293, 4294901760
    %295 = vmatpush1.xpose.msra.mxu0 %v294
    %296 = vmatprep.subr.mxu0 0.0
    %v297 = vand.u32 %v108, 4294901760
    %v298 = vsub.f32 %v108, %v297
    %v299 = vand.u32 %v298, 4294901760
    %v300 = vsub.f32 %v298, %v299
    %v301 = vand.u32 %v300, 4294901760
    %302 = vmatpush1.xpose.msra.mxu0 %v301
    %303 = vmatprep.subr.mxu0 0.0
    %v304 = vand.u32 %v111, 4294901760
    %v305 = vsub.f32 %v111, %v304
    %v306 = vand.u32 %v305, 4294901760
    %v307 = vsub.f32 %v305, %v306
    %v308 = vand.u32 %v307, 4294901760
    %309 = vmatpush1.xpose.msra.mxu0 %v308
    %310 = vmatprep.subr.mxu0 0.0
    %v311 = vand.u32 %v114, 4294901760
    %v312 = vsub.f32 %v114, %v311
    %v313 = vand.u32 %v312, 4294901760
    %v314 = vsub.f32 %v312, %v313
    %v315 = vand.u32 %v314, 4294901760
    %316 = vmatpush1.xpose.msra.mxu0 %v315
    %317 = vmatprep.subr.mxu0 0.0
    %v318 = vand.u32 %v117, 4294901760
    %v319 = vsub.f32 %v117, %v318
    %v320 = vand.u32 %v319, 4294901760
    %v321 = vsub.f32 %v319, %v320
    %v322 = vand.u32 %v321, 4294901760
    %323 = vmatpush1.xpose.msra.mxu0 %v322
    %324 = vmatprep.subr.mxu0 0.0
    %v325 = vand.u32 %v120, 4294901760
    %v326 = vsub.f32 %v120, %v325
    %v327 = vand.u32 %v326, 4294901760
    %v328 = vsub.f32 %v326, %v327
    %v329 = vand.u32 %v328, 4294901760
    %330 = vmatpush1.xpose.msra.mxu0 %v329
    %331 = vmatprep.subr.mxu0 0.0
    %v332 = vand.u32 %v123, 4294901760
    %v333 = vsub.f32 %v123, %v332
    %v334 = vand.u32 %v333, 4294901760
    %v335 = vsub.f32 %v333, %v334
    %v336 = vand.u32 %v335, 4294901760
    %337 = vmatpush1.xpose.msra.mxu0 %v336
    %338 = vmatprep.subr.mxu0 0.0
    %v339 = vand.u32 %v126, 4294901760
    %v340 = vsub.f32 %v126, %v339
    %v341 = vand.u32 %v340, 4294901760
    %v342 = vsub.f32 %v340, %v341
    %v343 = vand.u32 %v342, 4294901760
    %344 = vmatpush1.xpose.msra.mxu0 %v343
    %345 = vmatprep.subr.mxu0 0.0
    %v346 = vand.u32 %v129, 4294901760
    %v347 = vsub.f32 %v129, %v346
    %v348 = vand.u32 %v347, 4294901760
    %v349 = vsub.f32 %v347, %v348
    %v350 = vand.u32 %v349, 4294901760
    %351 = vmatpush1.xpose.msra.mxu0 %v350
    %352 = vmatprep.subr.mxu0 0.0
    %v353 = vand.u32 %v132, 4294901760
    %v354 = vsub.f32 %v132, %v353
    %v355 = vand.u32 %v354, 4294901760
    %v356 = vsub.f32 %v354, %v355
    %v357 = vand.u32 %v356, 4294901760
    %358 = vmatpush1.xpose.msra.mxu0 %v357
    %359 = vmatprep.subr.mxu0 0.0
    %v360 = vand.u32 %v135, 4294901760
    %v361 = vsub.f32 %v135, %v360
    %v362 = vand.u32 %v361, 4294901760
    %v363 = vsub.f32 %v361, %v362
    %v364 = vand.u32 %v363, 4294901760
    %365 = vmatpush1.xpose.msra.mxu0 %v364
    %366 = vmatprep.subr.mxu0 0.0
    %v367 = vand.u32 %v138, 4294901760
    %v368 = vsub.f32 %v138, %v367
    %v369 = vand.u32 %v368, 4294901760
    %v370 = vsub.f32 %v368, %v369
    %v371 = vand.u32 %v370, 4294901760
    %372 = vmatpush1.xpose.msra.mxu0 %v371
    %373 = vmatprep.subr.mxu0 0.0
    %374 = vmatpush1.xpose.msra.mxu0 0.0
    %375 = vmatprep.subr.mxu0 0.0
    %376 = vmatpush1.xpose.msra.mxu0 0.0
    %377 = vmatprep.subr.mxu0 0.0
    %378 = vmatpush1.xpose.msra.mxu0 0.0
    %379 = vmatprep.subr.mxu0 0.0
    %380 = vmatpush1.xpose.msra.mxu0 0.0
    %381 = vmatprep.subr.mxu0 0.0
    %382 = vmatpush1.xpose.msra.mxu0 0.0
    %383 = vmatprep.subr.mxu0 0.0
    %384 = vmatpush1.xpose.msra.mxu0 0.0
    %385 = vmatprep.subr.mxu0 0.0
    %386 = vmatpush1.xpose.msra.mxu0 0.0
    %387 = vmatprep.subr.mxu0 0.0
    %388 = vmatpush1.xpose.msra.mxu0 0.0
    %389 = vmatprep.subr.mxu0 0.0
    %390 = vmatpush1.xpose.msra.mxu0 0.0
    %391 = vmatprep.subr.mxu0 0.0
    %392 = vmatpush1.xpose.msra.mxu0 0.0
    %393 = vmatprep.subr.mxu0 0.0
    %394 = vmatpush1.xpose.msra.mxu0 0.0
    %395 = vmatprep.subr.mxu0 0.0
    %396 = vmatpush1.xpose.msra.mxu0 0.0
    %397 = vmatprep.subr.mxu0 0.0
    %398 = vmatpush1.xpose.msra.mxu0 0.0
    %399 = vmatprep.subr.mxu0 0.0
    %400 = vmatpush1.xpose.msra.mxu0 0.0
    %401 = vmatprep.subr.mxu0 0.0
    %402 = vmatpush1.xpose.msra.mxu0 0.0
    %403 = vmatprep.subr.mxu0 0.0
    %404 = vmatpush1.xpose.msra.mxu0 0.0
    %405 = vmatprep.mubr.f32.mxu0 0.0
    %v406 = vand.u32 %v81, 4294901760
    %407 = vmatmul.mubr.f32.gmra.mrb[0].mxu0 %v406
    %v408 = vpop.f32.mrb[0].mxu0
    %v409 = vadd.f32 %v228, %v408
    %v410 = vpop.f32.mrb[0].mxu0
    %411 = vmatprep.mubr.f32.mxu0 0.0
    %v412 = vand.u32 %v84, 4294901760
    %413 = vmatmul.mubr.f32.gmra.mrb[0].mxu0 %v412
    %v414 = vpop.f32.mrb[0].mxu0
    %v415 = vadd.f32 %v238, %v414
    %v416 = vpop.f32.mrb[0].mxu0
    %417 = vmatprep.mubr.f32.mxu0 0.0
    %v418 = vand.u32 %v87, 4294901760
    %419 = vmatmul.mubr.f32.gmra.mrb[0].mxu0 %v418
    %v420 = vpop.f32.mrb[0].mxu0
    %v421 = vadd.f32 %v248, %v420
    %v422 = vpop.f32.mrb[0].mxu0
    %423 = vmatprep.mubr.f32.mxu0 0.0
    %v424 = vand.u32 %v90, 4294901760
    %425 = vmatmul.mubr.f32.gmra.mrb[0].mxu0 %v424
    %v426 = vpop.f32.mrb[0].mxu0
    %v427 = vadd.f32 %v258, %v426
    %v428 = vpop.f32.mrb[0].mxu0
    %429 = vdwg.mxu0
    %430 = vmatprep.subr.mxu0 0.0
    %v431 = vand.u32 %v93, 4294901760
    %v432 = vsub.f32 %v93, %v431
    %433 = vmatpush1.xpose.msra.mxu0 %v432
    %434 = vmatprep.subr.mxu0 0.0
    %v435 = vand.u32 %v96, 4294901760
    %v436 = vsub.f32 %v96, %v435
    %437 = vmatpush1.xpose.msra.mxu0 %v436
    %438 = vmatprep.subr.mxu0 0.0
    %v439 = vand.u32 %v99, 4294901760
    %v440 = vsub.f32 %v99, %v439
    %441 = vmatpush1.xpose.msra.mxu0 %v440
    %442 = vmatprep.subr.mxu0 0.0
    %v443 = vand.u32 %v102, 4294901760
    %v444 = vsub.f32 %v102, %v443
    %445 = vmatpush1.xpose.msra.mxu0 %v444
    %446 = vmatprep.subr.mxu0 0.0
    %v447 = vand.u32 %v105, 4294901760
    %v448 = vsub.f32 %v105, %v447
    %449 = vmatpush1.xpose.msra.mxu0 %v448
    %450 = vmatprep.subr.mxu0 0.0
    %v451 = vand.u32 %v108, 4294901760
    %v452 = vsub.f32 %v108, %v451
    %453 = vmatpush1.xpose.msra.mxu0 %v452
    %454 = vmatprep.subr.mxu0 0.0
    %v455 = vand.u32 %v111, 4294901760
    %v456 = vsub.f32 %v111, %v455
    %457 = vmatpush1.xpose.msra.mxu0 %v456
    %458 = vmatprep.subr.mxu0 0.0
    %v459 = vand.u32 %v114, 4294901760
    %v460 = vsub.f32 %v114, %v459
    %461 = vmatpush1.xpose.msra.mxu0 %v460
    %462 = vmatprep.subr.mxu0 0.0
    %v463 = vand.u32 %v117, 4294901760
    %v464 = vsub.f32 %v117, %v463
    %465 = vmatpush1.xpose.msra.mxu0 %v464
    %466 = vmatprep.subr.mxu0 0.0
    %v467 = vand.u32 %v120, 4294901760
    %v468 = vsub.f32 %v120, %v467
    %469 = vmatpush1.xpose.msra.mxu0 %v468
    %470 = vmatprep.subr.mxu0 0.0
    %v471 = vand.u32 %v123, 4294901760
    %v472 = vsub.f32 %v123, %v471
    %473 = vmatpush1.xpose.msra.mxu0 %v472
    %474 = vmatprep.subr.mxu0 0.0
    %v475 = vand.u32 %v126, 4294901760
    %v476 = vsub.f32 %v126, %v475
    %477 = vmatpush1.xpose.msra.mxu0 %v476
    %478 = vmatprep.subr.mxu0 0.0
    %v479 = vand.u32 %v129, 4294901760
    %v480 = vsub.f32 %v129, %v479
    %481 = vmatpush1.xpose.msra.mxu0 %v480
    %482 = vmatprep.subr.mxu0 0.0
    %v483 = vand.u32 %v132, 4294901760
    %v484 = vsub.f32 %v132, %v483
    %485 = vmatpush1.xpose.msra.mxu0 %v484
    %486 = vmatprep.subr.mxu0 0.0
    %v487 = vand.u32 %v135, 4294901760
    %v488 = vsub.f32 %v135, %v487
    %489 = vmatpush1.xpose.msra.mxu0 %v488
    %490 = vmatprep.subr.mxu0 0.0
    %v491 = vand.u32 %v138, 4294901760
    %v492 = vsub.f32 %v138, %v491
    %493 = vmatpush1.xpose.msra.mxu0 %v492
    %494 = vmatprep.subr.mxu0 0.0
    %495 = vmatpush1.xpose.msra.mxu0 0.0
    %496 = vmatprep.subr.mxu0 0.0
    %497 = vmatpush1.xpose.msra.mxu0 0.0
    %498 = vmatprep.subr.mxu0 0.0
    %499 = vmatpush1.xpose.msra.mxu0 0.0
    %500 = vmatprep.subr.mxu0 0.0
    %501 = vmatpush1.xpose.msra.mxu0 0.0
    %502 = vmatprep.subr.mxu0 0.0
    %503 = vmatpush1.xpose.msra.mxu0 0.0
    %504 = vmatprep.subr.mxu0 0.0
    %505 = vmatpush1.xpose.msra.mxu0 0.0
    %506 = vmatprep.subr.mxu0 0.0
    %507 = vmatpush1.xpose.msra.mxu0 0.0
    %508 = vmatprep.subr.mxu0 0.0
    %509 = vmatpush1.xpose.msra.mxu0 0.0
    %510 = vmatprep.subr.mxu0 0.0
    %511 = vmatpush1.xpose.msra.mxu0 0.0
    %512 = vmatprep.subr.mxu0 0.0
    %513 = vmatpush1.xpose.msra.mxu0 0.0
    %514 = vmatprep.subr.mxu0 0.0
    %515 = vmatpush1.xpose.msra.mxu0 0.0
    %516 = vmatprep.subr.mxu0 0.0
    %517 = vmatpush1.xpose.msra.mxu0 0.0
    %518 = vmatprep.subr.mxu0 0.0
    %519 = vmatpush1.xpose.msra.mxu0 0.0
    %520 = vmatprep.subr.mxu0 0.0
    %521 = vmatpush1.xpose.msra.mxu0 0.0
    %522 = vmatprep.subr.mxu0 0.0
    %523 = vmatpush1.xpose.msra.mxu0 0.0
    %524 = vmatprep.subr.mxu0 0.0
    %525 = vmatpush1.xpose.msra.mxu0 0.0
    %526 = vmatprep.mubr.f32.mxu0 0.0
    %v527 = vand.u32 %v81, 4294901760
    %v528 = vsub.f32 %v81, %v527
    %529 = vmatmul.mubr.f32.gmra.mrb[0].mxu0 %v528
    %v530 = vpop.f32.mrb[0].mxu0
    %v531 = vadd.f32 %v409, %v530
    %v532 = vpop.f32.mrb[0].mxu0
    %533 = vmatprep.mubr.f32.mxu0 0.0
    %v534 = vand.u32 %v84, 4294901760
    %v535 = vsub.f32 %v84, %v534
    %536 = vmatmul.mubr.f32.gmra.mrb[0].mxu0 %v535
    %v537 = vpop.f32.mrb[0].mxu0
    %v538 = vadd.f32 %v415, %v537
    %v539 = vpop.f32.mrb[0].mxu0
    %540 = vmatprep.mubr.f32.mxu0 0.0
    %v541 = vand.u32 %v87, 4294901760
    %v542 = vsub.f32 %v87, %v541
    %543 = vmatmul.mubr.f32.gmra.mrb[0].mxu0 %v542
    %v544 = vpop.f32.mrb[0].mxu0
    %v545 = vadd.f32 %v421, %v544
    %v546 = vpop.f32.mrb[0].mxu0
    %547 = vmatprep.mubr.f32.mxu0 0.0
    %v548 = vand.u32 %v90, 4294901760
    %v549 = vsub.f32 %v90, %v548
    %550 = vmatmul.mubr.f32.gmra.mrb[0].mxu0 %v549
    %v551 = vpop.f32.mrb[0].mxu0
    %v552 = vadd.f32 %v427, %v551
    %v553 = vpop.f32.mrb[0].mxu0
    %554 = vdwg.mxu0
    %555 = vmatprep.subr.mxu0 0.0
    %v556 = vand.u32 %v93, 4294901760
    %557 = vmatpush1.xpose.msra.mxu0 %v556
    %558 = vmatprep.subr.mxu0 0.0
    %v559 = vand.u32 %v96, 4294901760
    %560 = vmatpush1.xpose.msra.mxu0 %v559
    %561 = vmatprep.subr.mxu0 0.0
    %v562 = vand.u32 %v99, 4294901760
    %563 = vmatpush1.xpose.msra.mxu0 %v562
    %564 = vmatprep.subr.mxu0 0.0
    %v565 = vand.u32 %v102, 4294901760
    %566 = vmatpush1.xpose.msra.mxu0 %v565
    %567 = vmatprep.subr.mxu0 0.0
    %v568 = vand.u32 %v105, 4294901760
    %569 = vmatpush1.xpose.msra.mxu0 %v568
    %570 = vmatprep.subr.mxu0 0.0
    %v571 = vand.u32 %v108, 4294901760
    %572 = vmatpush1.xpose.msra.mxu0 %v571
    %573 = vmatprep.subr.mxu0 0.0
    %v574 = vand.u32 %v111, 4294901760
    %575 = vmatpush1.xpose.msra.mxu0 %v574
    %576 = vmatprep.subr.mxu0 0.0
    %v577 = vand.u32 %v114, 4294901760
    %578 = vmatpush1.xpose.msra.mxu0 %v577
    %579 = vmatprep.subr.mxu0 0.0
    %v580 = vand.u32 %v117, 4294901760
    %581 = vmatpush1.xpose.msra.mxu0 %v580
    %582 = vmatprep.subr.mxu0 0.0
    %v583 = vand.u32 %v120, 4294901760
    %584 = vmatpush1.xpose.msra.mxu0 %v583
    %585 = vmatprep.subr.mxu0 0.0
    %v586 = vand.u32 %v123, 4294901760
    %587 = vmatpush1.xpose.msra.mxu0 %v586
    %588 = vmatprep.subr.mxu0 0.0
    %v589 = vand.u32 %v126, 4294901760
    %590 = vmatpush1.xpose.msra.mxu0 %v589
    %591 = vmatprep.subr.mxu0 0.0
    %v592 = vand.u32 %v129, 4294901760
    %593 = vmatpush1.xpose.msra.mxu0 %v592
    %594 = vmatprep.subr.mxu0 0.0
    %v595 = vand.u32 %v132, 4294901760
    %596 = vmatpush1.xpose.msra.mxu0 %v595
    %597 = vmatprep.subr.mxu0 0.0
    %v598 = vand.u32 %v135, 4294901760
    %599 = vmatpush1.xpose.msra.mxu0 %v598
    %600 = vmatprep.subr.mxu0 0.0
    %v601 = vand.u32 %v138, 4294901760
    %602 = vmatpush1.xpose.msra.mxu0 %v601
    %603 = vmatprep.subr.mxu0 0.0
    %604 = vmatpush1.xpose.msra.mxu0 0.0
    %605 = vmatprep.subr.mxu0 0.0
    %606 = vmatpush1.xpose.msra.mxu0 0.0
    %607 = vmatprep.subr.mxu0 0.0
    %608 = vmatpush1.xpose.msra.mxu0 0.0
    %609 = vmatprep.subr.mxu0 0.0
    %610 = vmatpush1.xpose.msra.mxu0 0.0
    %611 = vmatprep.subr.mxu0 0.0
    %612 = vmatpush1.xpose.msra.mxu0 0.0
    %613 = vmatprep.subr.mxu0 0.0
    %614 = vmatpush1.xpose.msra.mxu0 0.0
    %615 = vmatprep.subr.mxu0 0.0
    %616 = vmatpush1.xpose.msra.mxu0 0.0
    %617 = vmatprep.subr.mxu0 0.0
    %618 = vmatpush1.xpose.msra.mxu0 0.0
    %619 = vmatprep.subr.mxu0 0.0
    %620 = vmatpush1.xpose.msra.mxu0 0.0
    %621 = vmatprep.subr.mxu0 0.0
    %622 = vmatpush1.xpose.msra.mxu0 0.0
    %623 = vmatprep.subr.mxu0 0.0
    %624 = vmatpush1.xpose.msra.mxu0 0.0
    %625 = vmatprep.subr.mxu0 0.0
    %626 = vmatpush1.xpose.msra.mxu0 0.0
    %627 = vmatprep.subr.mxu0 0.0
    %628 = vmatpush1.xpose.msra.mxu0 0.0
    %629 = vmatprep.subr.mxu0 0.0
    %630 = vmatpush1.xpose.msra.mxu0 0.0
    %631 = vmatprep.subr.mxu0 0.0
    %632 = vmatpush1.xpose.msra.mxu0 0.0
    %633 = vmatprep.subr.mxu0 0.0
    %634 = vmatpush1.xpose.msra.mxu0 0.0
    %635 = vmatprep.mubr.f32.mxu0 0.0
    %v636 = vand.u32 %v81, 4294901760
    %v637 = vsub.f32 %v81, %v636
    %v638 = vand.u32 %v637, 4294901760
    %639 = vmatmul.mubr.f32.gmra.mrb[0].mxu0 %v638
    %v640 = vpop.f32.mrb[0].mxu0
    %v641 = vadd.f32 %v531, %v640
    %v642 = vpop.f32.mrb[0].mxu0
    %643 = vmatprep.mubr.f32.mxu0 0.0
    %v644 = vand.u32 %v84, 4294901760
    %v645 = vsub.f32 %v84, %v644
    %v646 = vand.u32 %v645, 4294901760
    %647 = vmatmul.mubr.f32.gmra.mrb[0].mxu0 %v646
    %v648 = vpop.f32.mrb[0].mxu0
    %v649 = vadd.f32 %v538, %v648
    %v650 = vpop.f32.mrb[0].mxu0
    %651 = vmatprep.mubr.f32.mxu0 0.0
    %v652 = vand.u32 %v87, 4294901760
    %v653 = vsub.f32 %v87, %v652
    %v654 = vand.u32 %v653, 4294901760
    %655 = vmatmul.mubr.f32.gmra.mrb[0].mxu0 %v654
    %v656 = vpop.f32.mrb[0].mxu0
    %v657 = vadd.f32 %v545, %v656
    %v658 = vpop.f32.mrb[0].mxu0
    %659 = vmatprep.mubr.f32.mxu0 0.0
    %v660 = vand.u32 %v90, 4294901760
    %v661 = vsub.f32 %v90, %v660
    %v662 = vand.u32 %v661, 4294901760
    %663 = vmatmul.mubr.f32.gmra.mrb[0].mxu0 %v662
    %v664 = vpop.f32.mrb[0].mxu0
    %v665 = vadd.f32 %v552, %v664
    %v666 = vpop.f32.mrb[0].mxu0
    %667 = vdwg.mxu0
    %668 = vmatprep.subr.mxu0 0.0
    %v669 = vand.u32 %v93, 4294901760
    %v670 = vsub.f32 %v93, %v669
    %v671 = vand.u32 %v670, 4294901760
    %672 = vmatpush1.xpose.msra.mxu0 %v671
    %673 = vmatprep.subr.mxu0 0.0
    %v674 = vand.u32 %v96, 4294901760
    %v675 = vsub.f32 %v96, %v674
    %v676 = vand.u32 %v675, 4294901760
    %677 = vmatpush1.xpose.msra.mxu0 %v676
    %678 = vmatprep.subr.mxu0 0.0
    %v679 = vand.u32 %v99, 4294901760
    %v680 = vsub.f32 %v99, %v679
    %v681 = vand.u32 %v680, 4294901760
    %682 = vmatpush1.xpose.msra.mxu0 %v681
    %683 = vmatprep.subr.mxu0 0.0
    %v684 = vand.u32 %v102, 4294901760
    %v685 = vsub.f32 %v102, %v684
    %v686 = vand.u32 %v685, 4294901760
    %687 = vmatpush1.xpose.msra.mxu0 %v686
    %688 = vmatprep.subr.mxu0 0.0
    %v689 = vand.u32 %v105, 4294901760
    %v690 = vsub.f32 %v105, %v689
    %v691 = vand.u32 %v690, 4294901760
    %692 = vmatpush1.xpose.msra.mxu0 %v691
    %693 = vmatprep.subr.mxu0 0.0
    %v694 = vand.u32 %v108, 4294901760
    %v695 = vsub.f32 %v108, %v694
    %v696 = vand.u32 %v695, 4294901760
    %697 = vmatpush1.xpose.msra.mxu0 %v696
    %698 = vmatprep.subr.mxu0 0.0
    %v699 = vand.u32 %v111, 4294901760
    %v700 = vsub.f32 %v111, %v699
    %v701 = vand.u32 %v700, 4294901760
    %702 = vmatpush1.xpose.msra.mxu0 %v701
    %703 = vmatprep.subr.mxu0 0.0
    %v704 = vand.u32 %v114, 4294901760
    %v705 = vsub.f32 %v114, %v704
    %v706 = vand.u32 %v705, 4294901760
    %707 = vmatpush1.xpose.msra.mxu0 %v706
    %708 = vmatprep.subr.mxu0 0.0
    %v709 = vand.u32 %v117, 4294901760
    %v710 = vsub.f32 %v117, %v709
    %v711 = vand.u32 %v710, 4294901760
    %712 = vmatpush1.xpose.msra.mxu0 %v711
    %713 = vmatprep.subr.mxu0 0.0
    %v714 = vand.u32 %v120, 4294901760
    %v715 = vsub.f32 %v120, %v714
    %v716 = vand.u32 %v715, 4294901760
    %717 = vmatpush1.xpose.msra.mxu0 %v716
    %718 = vmatprep.subr.mxu0 0.0
    %v719 = vand.u32 %v123, 4294901760
    %v720 = vsub.f32 %v123, %v719
    %v721 = vand.u32 %v720, 4294901760
    %722 = vmatpush1.xpose.msra.mxu0 %v721
    %723 = vmatprep.subr.mxu0 0.0
    %v724 = vand.u32 %v126, 4294901760
    %v725 = vsub.f32 %v126, %v724
    %v726 = vand.u32 %v725, 4294901760
    %727 = vmatpush1.xpose.msra.mxu0 %v726
    %728 = vmatprep.subr.mxu0 0.0
    %v729 = vand.u32 %v129, 4294901760
    %v730 = vsub.f32 %v129, %v729
    %v731 = vand.u32 %v730, 4294901760
    %732 = vmatpush1.xpose.msra.mxu0 %v731
    %733 = vmatprep.subr.mxu0 0.0
    %v734 = vand.u32 %v132, 4294901760
    %v735 = vsub.f32 %v132, %v734
    %v736 = vand.u32 %v735, 4294901760
    %737 = vmatpush1.xpose.msra.mxu0 %v736
    %738 = vmatprep.subr.mxu0 0.0
    %v739 = vand.u32 %v135, 4294901760
    %v740 = vsub.f32 %v135, %v739
    %v741 = vand.u32 %v740, 4294901760
    %742 = vmatpush1.xpose.msra.mxu0 %v741
    %743 = vmatprep.subr.mxu0 0.0
    %v744 = vand.u32 %v138, 4294901760
    %v745 = vsub.f32 %v138, %v744
    %v746 = vand.u32 %v745, 4294901760
    %747 = vmatpush1.xpose.msra.mxu0 %v746
    %748 = vmatprep.subr.mxu0 0.0
    %749 = vmatpush1.xpose.msra.mxu0 0.0
    %750 = vmatprep.subr.mxu0 0.0
    %751 = vmatpush1.xpose.msra.mxu0 0.0
    %752 = vmatprep.subr.mxu0 0.0
    %753 = vmatpush1.xpose.msra.mxu0 0.0
    %754 = vmatprep.subr.mxu0 0.0
    %755 = vmatpush1.xpose.msra.mxu0 0.0
    %756 = vmatprep.subr.mxu0 0.0
    %757 = vmatpush1.xpose.msra.mxu0 0.0
    %758 = vmatprep.subr.mxu0 0.0
    %759 = vmatpush1.xpose.msra.mxu0 0.0
    %760 = vmatprep.subr.mxu0 0.0
    %761 = vmatpush1.xpose.msra.mxu0 0.0
    %762 = vmatprep.subr.mxu0 0.0
    %763 = vmatpush1.xpose.msra.mxu0 0.0
    %764 = vmatprep.subr.mxu0 0.0
    %765 = vmatpush1.xpose.msra.mxu0 0.0
    %766 = vmatprep.subr.mxu0 0.0
    %767 = vmatpush1.xpose.msra.mxu0 0.0
    %768 = vmatprep.subr.mxu0 0.0
    %769 = vmatpush1.xpose.msra.mxu0 0.0
    %770 = vmatprep.subr.mxu0 0.0
    %771 = vmatpush1.xpose.msra.mxu0 0.0
    %772 = vmatprep.subr.mxu0 0.0
    %773 = vmatpush1.xpose.msra.mxu0 0.0
    %774 = vmatprep.subr.mxu0 0.0
    %775 = vmatpush1.xpose.msra.mxu0 0.0
    %776 = vmatprep.subr.mxu0 0.0
    %777 = vmatpush1.xpose.msra.mxu0 0.0
    %778 = vmatprep.subr.mxu0 0.0
    %779 = vmatpush1.xpose.msra.mxu0 0.0
    %780 = vmatprep.mubr.f32.mxu0 0.0
    %v781 = vand.u32 %v81, 4294901760
    %782 = vmatmul.mubr.f32.gmra.mrb[0].mxu0 %v781
    %v783 = vpop.f32.mrb[0].mxu0
    %v784 = vadd.f32 %v641, %v783
    %v785 = vpop.f32.mrb[0].mxu0
    %786 = vmatprep.mubr.f32.mxu0 0.0
    %v787 = vand.u32 %v84, 4294901760
    %788 = vmatmul.mubr.f32.gmra.mrb[0].mxu0 %v787
    %v789 = vpop.f32.mrb[0].mxu0
    %v790 = vadd.f32 %v649, %v789
    %v791 = vpop.f32.mrb[0].mxu0
    %792 = vmatprep.mubr.f32.mxu0 0.0
    %v793 = vand.u32 %v87, 4294901760
    %794 = vmatmul.mubr.f32.gmra.mrb[0].mxu0 %v793
    %v795 = vpop.f32.mrb[0].mxu0
    %v796 = vadd.f32 %v657, %v795
    %v797 = vpop.f32.mrb[0].mxu0
    %798 = vmatprep.mubr.f32.mxu0 0.0
    %v799 = vand.u32 %v90, 4294901760
    %800 = vmatmul.mubr.f32.gmra.mrb[0].mxu0 %v799
    %v801 = vpop.f32.mrb[0].mxu0
    %v802 = vadd.f32 %v665, %v801
    %v803 = vpop.f32.mrb[0].mxu0
    %804 = vdwg.mxu0
    %805 = vmatprep.subr.mxu0 0.0
    %v806 = vand.u32 %v93, 4294901760
    %807 = vmatpush1.xpose.msra.mxu0 %v806
    %808 = vmatprep.subr.mxu0 0.0
    %v809 = vand.u32 %v96, 4294901760
    %810 = vmatpush1.xpose.msra.mxu0 %v809
    %811 = vmatprep.subr.mxu0 0.0
    %v812 = vand.u32 %v99, 4294901760
    %813 = vmatpush1.xpose.msra.mxu0 %v812
    %814 = vmatprep.subr.mxu0 0.0
    %v815 = vand.u32 %v102, 4294901760
    %816 = vmatpush1.xpose.msra.mxu0 %v815
    %817 = vmatprep.subr.mxu0 0.0
    %v818 = vand.u32 %v105, 4294901760
    %819 = vmatpush1.xpose.msra.mxu0 %v818
    %820 = vmatprep.subr.mxu0 0.0
    %v821 = vand.u32 %v108, 4294901760
    %822 = vmatpush1.xpose.msra.mxu0 %v821
    %823 = vmatprep.subr.mxu0 0.0
    %v824 = vand.u32 %v111, 4294901760
    %825 = vmatpush1.xpose.msra.mxu0 %v824
    %826 = vmatprep.subr.mxu0 0.0
    %v827 = vand.u32 %v114, 4294901760
    %828 = vmatpush1.xpose.msra.mxu0 %v827
    %829 = vmatprep.subr.mxu0 0.0
    %v830 = vand.u32 %v117, 4294901760
    %831 = vmatpush1.xpose.msra.mxu0 %v830
    %832 = vmatprep.subr.mxu0 0.0
    %v833 = vand.u32 %v120, 4294901760
    %834 = vmatpush1.xpose.msra.mxu0 %v833
    %835 = vmatprep.subr.mxu0 0.0
    %v836 = vand.u32 %v123, 4294901760
    %837 = vmatpush1.xpose.msra.mxu0 %v836
    %838 = vmatprep.subr.mxu0 0.0
    %v839 = vand.u32 %v126, 4294901760
    %840 = vmatpush1.xpose.msra.mxu0 %v839
    %841 = vmatprep.subr.mxu0 0.0
    %v842 = vand.u32 %v129, 4294901760
    %843 = vmatpush1.xpose.msra.mxu0 %v842
    %844 = vmatprep.subr.mxu0 0.0
    %v845 = vand.u32 %v132, 4294901760
    %846 = vmatpush1.xpose.msra.mxu0 %v845
    %847 = vmatprep.subr.mxu0 0.0
    %v848 = vand.u32 %v135, 4294901760
    %849 = vmatpush1.xpose.msra.mxu0 %v848
    %850 = vmatprep.subr.mxu0 0.0
    %v851 = vand.u32 %v138, 4294901760
    %852 = vmatpush1.xpose.msra.mxu0 %v851
    %853 = vmatprep.subr.mxu0 0.0
    %854 = vmatpush1.xpose.msra.mxu0 0.0
    %855 = vmatprep.subr.mxu0 0.0
    %856 = vmatpush1.xpose.msra.mxu0 0.0
    %857 = vmatprep.subr.mxu0 0.0
    %858 = vmatpush1.xpose.msra.mxu0 0.0
    %859 = vmatprep.subr.mxu0 0.0
    %860 = vmatpush1.xpose.msra.mxu0 0.0
    %861 = vmatprep.subr.mxu0 0.0
    %862 = vmatpush1.xpose.msra.mxu0 0.0
    %863 = vmatprep.subr.mxu0 0.0
    %864 = vmatpush1.xpose.msra.mxu0 0.0
    %865 = vmatprep.subr.mxu0 0.0
    %866 = vmatpush1.xpose.msra.mxu0 0.0
    %867 = vmatprep.subr.mxu0 0.0
    %868 = vmatpush1.xpose.msra.mxu0 0.0
    %869 = vmatprep.subr.mxu0 0.0
    %870 = vmatpush1.xpose.msra.mxu0 0.0
    %871 = vmatprep.subr.mxu0 0.0
    %872 = vmatpush1.xpose.msra.mxu0 0.0
    %873 = vmatprep.subr.mxu0 0.0
    %874 = vmatpush1.xpose.msra.mxu0 0.0
    %875 = vmatprep.subr.mxu0 0.0
    %876 = vmatpush1.xpose.msra.mxu0 0.0
    %877 = vmatprep.subr.mxu0 0.0
    %878 = vmatpush1.xpose.msra.mxu0 0.0
    %879 = vmatprep.subr.mxu0 0.0
    %880 = vmatpush1.xpose.msra.mxu0 0.0
    %881 = vmatprep.subr.mxu0 0.0
    %882 = vmatpush1.xpose.msra.mxu0 0.0
    %883 = vmatprep.subr.mxu0 0.0
    %884 = vmatpush1.xpose.msra.mxu0 0.0
    %885 = vmatprep.mubr.f32.mxu0 0.0
    %v886 = vand.u32 %v81, 4294901760
    %887 = vmatmul.mubr.f32.gmra.mrb[0].mxu0 %v886
    %v888 = vpop.f32.mrb[0].mxu0
    %v889 = vadd.f32 %v784, %v888
    %v890 = vpop.f32.mrb[0].mxu0
    %891 = vmatprep.mubr.f32.mxu0 0.0
    %v892 = vand.u32 %v84, 4294901760
    %893 = vmatmul.mubr.f32.gmra.mrb[0].mxu0 %v892
    %v894 = vpop.f32.mrb[0].mxu0
    %v895 = vadd.f32 %v790, %v894
    %v896 = vpop.f32.mrb[0].mxu0
    %897 = vmatprep.mubr.f32.mxu0 0.0
    %v898 = vand.u32 %v87, 4294901760
    %899 = vmatmul.mubr.f32.gmra.mrb[0].mxu0 %v898
    %v900 = vpop.f32.mrb[0].mxu0
    %v901 = vadd.f32 %v796, %v900
    %v902 = vpop.f32.mrb[0].mxu0
    %903 = vmatprep.mubr.f32.mxu0 0.0
    %v904 = vand.u32 %v90, 4294901760
    %905 = vmatmul.mubr.f32.gmra.mrb[0].mxu0 %v904
    %v906 = vpop.f32.mrb[0].mxu0
    %v907 = vadd.f32 %v802, %v906
    %v908 = vpop.f32.mrb[0].mxu0
    %909 = vdwg.mxu0
    %v910 = vmax.f32 %v889, 0.0
    %v911 = vmax.f32 %v895, 0.0
    %v912 = vmax.f32 %v901, 0.0
    %v913 = vmax.f32 %v907, 0.0
    %915 = vset.pattern.permute.xlu0 0
    %916 = vperm.xlu0 %915, %v37
    %v917 = vpop.permute.xlu0 %916
    %920 = vset.pattern.permute.xlu0 0
    %921 = vperm.xlu0 %920, %v38
    %v922 = vpop.permute.xlu0 %921
    %925 = vset.pattern.permute.xlu0 0
    %926 = vperm.xlu0 %925, %v39
    %v927 = vpop.permute.xlu0 %926
    %930 = vset.pattern.permute.xlu0 0
    %931 = vperm.xlu0 %930, %v40
    %v932 = vpop.permute.xlu0 %931
    %v935 = vsel %vm79, %v28, 0
    %v938 = vsel %vm79, %v29, 0
    %v941 = vsel %vm79, %v30, 0
    %v944 = vsel %vm79, %v31, 0
    %946 = vmatprep.subr.mxu0 0.0
    %v947 = vand.u32 %v910, 4294901760
    %948 = vmatpush1.msra.mxu0 %v947
    %949 = vmatprep.subr.mxu0 0.0
    %v950 = vand.u32 %v911, 4294901760
    %951 = vmatpush1.msra.mxu0 %v950
    %952 = vmatprep.subr.mxu0 0.0
    %v953 = vand.u32 %v912, 4294901760
    %954 = vmatpush1.msra.mxu0 %v953
    %955 = vmatprep.subr.mxu0 0.0
    %v956 = vand.u32 %v913, 4294901760
    %957 = vmatpush1.msra.mxu0 %v956
    %958 = vmatprep.subr.mxu0 0.0
    %959 = vmatpush1.msra.mxu0 0.0
    %960 = vmatprep.subr.mxu0 0.0
    %961 = vmatpush1.msra.mxu0 0.0
    %962 = vmatprep.subr.mxu0 0.0
    %963 = vmatpush1.msra.mxu0 0.0
    %964 = vmatprep.subr.mxu0 0.0
    %965 = vmatpush1.msra.mxu0 0.0
    %966 = vmatprep.subr.mxu0 0.0
    %967 = vmatpush1.msra.mxu0 0.0
    %968 = vmatprep.subr.mxu0 0.0
    %969 = vmatpush1.msra.mxu0 0.0
    %970 = vmatprep.subr.mxu0 0.0
    %971 = vmatpush1.msra.mxu0 0.0
    %972 = vmatprep.subr.mxu0 0.0
    %973 = vmatpush1.msra.mxu0 0.0
    %974 = vmatprep.subr.mxu0 0.0
    %975 = vmatpush1.msra.mxu0 0.0
    %976 = vmatprep.subr.mxu0 0.0
    %977 = vmatpush1.msra.mxu0 0.0
    %978 = vmatprep.subr.mxu0 0.0
    %979 = vmatpush1.msra.mxu0 0.0
    %980 = vmatprep.subr.mxu0 0.0
    %981 = vmatpush1.msra.mxu0 0.0
    %982 = vmatprep.subr.mxu0 0.0
    %983 = vmatpush1.msra.mxu0 0.0
    %984 = vmatprep.subr.mxu0 0.0
    %985 = vmatpush1.msra.mxu0 0.0
    %986 = vmatprep.subr.mxu0 0.0
    %987 = vmatpush1.msra.mxu0 0.0
    %988 = vmatprep.subr.mxu0 0.0
    %989 = vmatpush1.msra.mxu0 0.0
    %990 = vmatprep.subr.mxu0 0.0
    %991 = vmatpush1.msra.mxu0 0.0
    %992 = vmatprep.subr.mxu0 0.0
    %993 = vmatpush1.msra.mxu0 0.0
    %994 = vmatprep.subr.mxu0 0.0
    %995 = vmatpush1.msra.mxu0 0.0
    %996 = vmatprep.subr.mxu0 0.0
    %997 = vmatpush1.msra.mxu0 0.0
    %998 = vmatprep.subr.mxu0 0.0
    %999 = vmatpush1.msra.mxu0 0.0
    %1000 = vmatprep.subr.mxu0 0.0
    %1001 = vmatpush1.msra.mxu0 0.0
    %1002 = vmatprep.subr.mxu0 0.0
    %1003 = vmatpush1.msra.mxu0 0.0
    %1004 = vmatprep.subr.mxu0 0.0
    %1005 = vmatpush1.msra.mxu0 0.0
    %1006 = vmatprep.subr.mxu0 0.0
    %1007 = vmatpush1.msra.mxu0 0.0
    %1008 = vmatprep.subr.mxu0 0.0
    %1009 = vmatpush1.msra.mxu0 0.0
    %1010 = vmatprep.subr.mxu0 0.0
    %1011 = vmatpush1.msra.mxu0 0.0
    %1012 = vmatprep.subr.mxu0 0.0
    %1013 = vmatpush1.msra.mxu0 0.0
    %1014 = vmatprep.mubr.f32.mxu0 0.0
    %v1015 = vand.u32 %v935, 4294901760
    %v1016 = vsub.f32 %v935, %v1015
    %v1017 = vand.u32 %v1016, 4294901760
    %v1018 = vsub.f32 %v1016, %v1017
    %v1019 = vand.u32 %v1018, 4294901760
    %1020 = vmatmul.mubr.f32.gmra.mrb[0].mxu0 %v1019
    %v1021 = vpop.f32.mrb[0].mxu0
    %v1022 = vadd.f32 %v917, %v1021
    %v1023 = vpop.f32.mrb[0].mxu0
    %1024 = vmatprep.mubr.f32.mxu0 0.0
    %v1025 = vand.u32 %v938, 4294901760
    %v1026 = vsub.f32 %v938, %v1025
    %v1027 = vand.u32 %v1026, 4294901760
    %v1028 = vsub.f32 %v1026, %v1027
    %v1029 = vand.u32 %v1028, 4294901760
    %1030 = vmatmul.mubr.f32.gmra.mrb[0].mxu0 %v1029
    %v1031 = vpop.f32.mrb[0].mxu0
    %v1032 = vadd.f32 %v922, %v1031
    %v1033 = vpop.f32.mrb[0].mxu0
    %1034 = vmatprep.mubr.f32.mxu0 0.0
    %v1035 = vand.u32 %v941, 4294901760
    %v1036 = vsub.f32 %v941, %v1035
    %v1037 = vand.u32 %v1036, 4294901760
    %v1038 = vsub.f32 %v1036, %v1037
    %v1039 = vand.u32 %v1038, 4294901760
    %1040 = vmatmul.mubr.f32.gmra.mrb[0].mxu0 %v1039
    %v1041 = vpop.f32.mrb[0].mxu0
    %v1042 = vadd.f32 %v927, %v1041
    %v1043 = vpop.f32.mrb[0].mxu0
    %1044 = vmatprep.mubr.f32.mxu0 0.0
    %v1045 = vand.u32 %v944, 4294901760
    %v1046 = vsub.f32 %v944, %v1045
    %v1047 = vand.u32 %v1046, 4294901760
    %v1048 = vsub.f32 %v1046, %v1047
    %v1049 = vand.u32 %v1048, 4294901760
    %1050 = vmatmul.mubr.f32.gmra.mrb[0].mxu0 %v1049
    %v1051 = vpop.f32.mrb[0].mxu0
    %v1052 = vadd.f32 %v932, %v1051
    %v1053 = vpop.f32.mrb[0].mxu0
    %1054 = vdwg.mxu0
    %1055 = vmatprep.subr.mxu0 0.0
    %v1056 = vand.u32 %v910, 4294901760
    %v1057 = vsub.f32 %v910, %v1056
    %v1058 = vand.u32 %v1057, 4294901760
    %v1059 = vsub.f32 %v1057, %v1058
    %v1060 = vand.u32 %v1059, 4294901760
    %1061 = vmatpush1.msra.mxu0 %v1060
    %1062 = vmatprep.subr.mxu0 0.0
    %v1063 = vand.u32 %v911, 4294901760
    %v1064 = vsub.f32 %v911, %v1063
    %v1065 = vand.u32 %v1064, 4294901760
    %v1066 = vsub.f32 %v1064, %v1065
    %v1067 = vand.u32 %v1066, 4294901760
    %1068 = vmatpush1.msra.mxu0 %v1067
    %1069 = vmatprep.subr.mxu0 0.0
    %v1070 = vand.u32 %v912, 4294901760
    %v1071 = vsub.f32 %v912, %v1070
    %v1072 = vand.u32 %v1071, 4294901760
    %v1073 = vsub.f32 %v1071, %v1072
    %v1074 = vand.u32 %v1073, 4294901760
    %1075 = vmatpush1.msra.mxu0 %v1074
    %1076 = vmatprep.subr.mxu0 0.0
    %v1077 = vand.u32 %v913, 4294901760
    %v1078 = vsub.f32 %v913, %v1077
    %v1079 = vand.u32 %v1078, 4294901760
    %v1080 = vsub.f32 %v1078, %v1079
    %v1081 = vand.u32 %v1080, 4294901760
    %1082 = vmatpush1.msra.mxu0 %v1081
    %1083 = vmatprep.subr.mxu0 0.0
    %1084 = vmatpush1.msra.mxu0 0.0
    %1085 = vmatprep.subr.mxu0 0.0
    %1086 = vmatpush1.msra.mxu0 0.0
    %1087 = vmatprep.subr.mxu0 0.0
    %1088 = vmatpush1.msra.mxu0 0.0
    %1089 = vmatprep.subr.mxu0 0.0
    %1090 = vmatpush1.msra.mxu0 0.0
    %1091 = vmatprep.subr.mxu0 0.0
    %1092 = vmatpush1.msra.mxu0 0.0
    %1093 = vmatprep.subr.mxu0 0.0
    %1094 = vmatpush1.msra.mxu0 0.0
    %1095 = vmatprep.subr.mxu0 0.0
    %1096 = vmatpush1.msra.mxu0 0.0
    %1097 = vmatprep.subr.mxu0 0.0
    %1098 = vmatpush1.msra.mxu0 0.0
    %1099 = vmatprep.subr.mxu0 0.0
    %1100 = vmatpush1.msra.mxu0 0.0
    %1101 = vmatprep.subr.mxu0 0.0
    %1102 = vmatpush1.msra.mxu0 0.0
    %1103 = vmatprep.subr.mxu0 0.0
    %1104 = vmatpush1.msra.mxu0 0.0
    %1105 = vmatprep.subr.mxu0 0.0
    %1106 = vmatpush1.msra.mxu0 0.0
    %1107 = vmatprep.subr.mxu0 0.0
    %1108 = vmatpush1.msra.mxu0 0.0
    %1109 = vmatprep.subr.mxu0 0.0
    %1110 = vmatpush1.msra.mxu0 0.0
    %1111 = vmatprep.subr.mxu0 0.0
    %1112 = vmatpush1.msra.mxu0 0.0
    %1113 = vmatprep.subr.mxu0 0.0
    %1114 = vmatpush1.msra.mxu0 0.0
    %1115 = vmatprep.subr.mxu0 0.0
    %1116 = vmatpush1.msra.mxu0 0.0
    %1117 = vmatprep.subr.mxu0 0.0
    %1118 = vmatpush1.msra.mxu0 0.0
    %1119 = vmatprep.subr.mxu0 0.0
    %1120 = vmatpush1.msra.mxu0 0.0
    %1121 = vmatprep.subr.mxu0 0.0
    %1122 = vmatpush1.msra.mxu0 0.0
    %1123 = vmatprep.subr.mxu0 0.0
    %1124 = vmatpush1.msra.mxu0 0.0
    %1125 = vmatprep.subr.mxu0 0.0
    %1126 = vmatpush1.msra.mxu0 0.0
    %1127 = vmatprep.subr.mxu0 0.0
    %1128 = vmatpush1.msra.mxu0 0.0
    %1129 = vmatprep.subr.mxu0 0.0
    %1130 = vmatpush1.msra.mxu0 0.0
    %1131 = vmatprep.subr.mxu0 0.0
    %1132 = vmatpush1.msra.mxu0 0.0
    %1133 = vmatprep.subr.mxu0 0.0
    %1134 = vmatpush1.msra.mxu0 0.0
    %1135 = vmatprep.subr.mxu0 0.0
    %1136 = vmatpush1.msra.mxu0 0.0
    %1137 = vmatprep.subr.mxu0 0.0
    %1138 = vmatpush1.msra.mxu0 0.0
    %1139 = vmatprep.mubr.f32.mxu0 0.0
    %v1140 = vand.u32 %v935, 4294901760
    %1141 = vmatmul.mubr.f32.gmra.mrb[0].mxu0 %v1140
    %v1142 = vpop.f32.mrb[0].mxu0
    %v1143 = vadd.f32 %v1022, %v1142
    %v1144 = vpop.f32.mrb[0].mxu0
    %1145 = vmatprep.mubr.f32.mxu0 0.0
    %v1146 = vand.u32 %v938, 4294901760
    %1147 = vmatmul.mubr.f32.gmra.mrb[0].mxu0 %v1146
    %v1148 = vpop.f32.mrb[0].mxu0
    %v1149 = vadd.f32 %v1032, %v1148
    %v1150 = vpop.f32.mrb[0].mxu0
    %1151 = vmatprep.mubr.f32.mxu0 0.0
    %v1152 = vand.u32 %v941, 4294901760
    %1153 = vmatmul.mubr.f32.gmra.mrb[0].mxu0 %v1152
    %v1154 = vpop.f32.mrb[0].mxu0
    %v1155 = vadd.f32 %v1042, %v1154
    %v1156 = vpop.f32.mrb[0].mxu0
    %1157 = vmatprep.mubr.f32.mxu0 0.0
    %v1158 = vand.u32 %v944, 4294901760
    %1159 = vmatmul.mubr.f32.gmra.mrb[0].mxu0 %v1158
    %v1160 = vpop.f32.mrb[0].mxu0
    %v1161 = vadd.f32 %v1052, %v1160
    %v1162 = vpop.f32.mrb[0].mxu0
    %1163 = vdwg.mxu0
    %1164 = vmatprep.subr.mxu0 0.0
    %v1165 = vand.u32 %v910, 4294901760
    %v1166 = vsub.f32 %v910, %v1165
    %1167 = vmatpush1.msra.mxu0 %v1166
    %1168 = vmatprep.subr.mxu0 0.0
    %v1169 = vand.u32 %v911, 4294901760
    %v1170 = vsub.f32 %v911, %v1169
    %1171 = vmatpush1.msra.mxu0 %v1170
    %1172 = vmatprep.subr.mxu0 0.0
    %v1173 = vand.u32 %v912, 4294901760
    %v1174 = vsub.f32 %v912, %v1173
    %1175 = vmatpush1.msra.mxu0 %v1174
    %1176 = vmatprep.subr.mxu0 0.0
    %v1177 = vand.u32 %v913, 4294901760
    %v1178 = vsub.f32 %v913, %v1177
    %1179 = vmatpush1.msra.mxu0 %v1178
    %1180 = vmatprep.subr.mxu0 0.0
    %1181 = vmatpush1.msra.mxu0 0.0
    %1182 = vmatprep.subr.mxu0 0.0
    %1183 = vmatpush1.msra.mxu0 0.0
    %1184 = vmatprep.subr.mxu0 0.0
    %1185 = vmatpush1.msra.mxu0 0.0
    %1186 = vmatprep.subr.mxu0 0.0
    %1187 = vmatpush1.msra.mxu0 0.0
    %1188 = vmatprep.subr.mxu0 0.0
    %1189 = vmatpush1.msra.mxu0 0.0
    %1190 = vmatprep.subr.mxu0 0.0
    %1191 = vmatpush1.msra.mxu0 0.0
    %1192 = vmatprep.subr.mxu0 0.0
    %1193 = vmatpush1.msra.mxu0 0.0
    %1194 = vmatprep.subr.mxu0 0.0
    %1195 = vmatpush1.msra.mxu0 0.0
    %1196 = vmatprep.subr.mxu0 0.0
    %1197 = vmatpush1.msra.mxu0 0.0
    %1198 = vmatprep.subr.mxu0 0.0
    %1199 = vmatpush1.msra.mxu0 0.0
    %1200 = vmatprep.subr.mxu0 0.0
    %1201 = vmatpush1.msra.mxu0 0.0
    %1202 = vmatprep.subr.mxu0 0.0
    %1203 = vmatpush1.msra.mxu0 0.0
    %1204 = vmatprep.subr.mxu0 0.0
    %1205 = vmatpush1.msra.mxu0 0.0
    %1206 = vmatprep.subr.mxu0 0.0
    %1207 = vmatpush1.msra.mxu0 0.0
    %1208 = vmatprep.subr.mxu0 0.0
    %1209 = vmatpush1.msra.mxu0 0.0
    %1210 = vmatprep.subr.mxu0 0.0
    %1211 = vmatpush1.msra.mxu0 0.0
    %1212 = vmatprep.subr.mxu0 0.0
    %1213 = vmatpush1.msra.mxu0 0.0
    %1214 = vmatprep.subr.mxu0 0.0
    %1215 = vmatpush1.msra.mxu0 0.0
    %1216 = vmatprep.subr.mxu0 0.0
    %1217 = vmatpush1.msra.mxu0 0.0
    %1218 = vmatprep.subr.mxu0 0.0
    %1219 = vmatpush1.msra.mxu0 0.0
    %1220 = vmatprep.subr.mxu0 0.0
    %1221 = vmatpush1.msra.mxu0 0.0
    %1222 = vmatprep.subr.mxu0 0.0
    %1223 = vmatpush1.msra.mxu0 0.0
    %1224 = vmatprep.subr.mxu0 0.0
    %1225 = vmatpush1.msra.mxu0 0.0
    %1226 = vmatprep.subr.mxu0 0.0
    %1227 = vmatpush1.msra.mxu0 0.0
    %1228 = vmatprep.subr.mxu0 0.0
    %1229 = vmatpush1.msra.mxu0 0.0
    %1230 = vmatprep.subr.mxu0 0.0
    %1231 = vmatpush1.msra.mxu0 0.0
    %1232 = vmatprep.subr.mxu0 0.0
    %1233 = vmatpush1.msra.mxu0 0.0
    %1234 = vmatprep.subr.mxu0 0.0
    %1235 = vmatpush1.msra.mxu0 0.0
    %1236 = vmatprep.mubr.f32.mxu0 0.0
    %v1237 = vand.u32 %v935, 4294901760
    %v1238 = vsub.f32 %v935, %v1237
    %1239 = vmatmul.mubr.f32.gmra.mrb[0].mxu0 %v1238
    %v1240 = vpop.f32.mrb[0].mxu0
    %v1241 = vadd.f32 %v1143, %v1240
    %v1242 = vpop.f32.mrb[0].mxu0
    %1243 = vmatprep.mubr.f32.mxu0 0.0
    %v1244 = vand.u32 %v938, 4294901760
    %v1245 = vsub.f32 %v938, %v1244
    %1246 = vmatmul.mubr.f32.gmra.mrb[0].mxu0 %v1245
    %v1247 = vpop.f32.mrb[0].mxu0
    %v1248 = vadd.f32 %v1149, %v1247
    %v1249 = vpop.f32.mrb[0].mxu0
    %1250 = vmatprep.mubr.f32.mxu0 0.0
    %v1251 = vand.u32 %v941, 4294901760
    %v1252 = vsub.f32 %v941, %v1251
    %1253 = vmatmul.mubr.f32.gmra.mrb[0].mxu0 %v1252
    %v1254 = vpop.f32.mrb[0].mxu0
    %v1255 = vadd.f32 %v1155, %v1254
    %v1256 = vpop.f32.mrb[0].mxu0
    %1257 = vmatprep.mubr.f32.mxu0 0.0
    %v1258 = vand.u32 %v944, 4294901760
    %v1259 = vsub.f32 %v944, %v1258
    %1260 = vmatmul.mubr.f32.gmra.mrb[0].mxu0 %v1259
    %v1261 = vpop.f32.mrb[0].mxu0
    %v1262 = vadd.f32 %v1161, %v1261
    %v1263 = vpop.f32.mrb[0].mxu0
    %1264 = vdwg.mxu0
    %1265 = vmatprep.subr.mxu0 0.0
    %v1266 = vand.u32 %v910, 4294901760
    %1267 = vmatpush1.msra.mxu0 %v1266
    %1268 = vmatprep.subr.mxu0 0.0
    %v1269 = vand.u32 %v911, 4294901760
    %1270 = vmatpush1.msra.mxu0 %v1269
    %1271 = vmatprep.subr.mxu0 0.0
    %v1272 = vand.u32 %v912, 4294901760
    %1273 = vmatpush1.msra.mxu0 %v1272
    %1274 = vmatprep.subr.mxu0 0.0
    %v1275 = vand.u32 %v913, 4294901760
    %1276 = vmatpush1.msra.mxu0 %v1275
    %1277 = vmatprep.subr.mxu0 0.0
    %1278 = vmatpush1.msra.mxu0 0.0
    %1279 = vmatprep.subr.mxu0 0.0
    %1280 = vmatpush1.msra.mxu0 0.0
    %1281 = vmatprep.subr.mxu0 0.0
    %1282 = vmatpush1.msra.mxu0 0.0
    %1283 = vmatprep.subr.mxu0 0.0
    %1284 = vmatpush1.msra.mxu0 0.0
    %1285 = vmatprep.subr.mxu0 0.0
    %1286 = vmatpush1.msra.mxu0 0.0
    %1287 = vmatprep.subr.mxu0 0.0
    %1288 = vmatpush1.msra.mxu0 0.0
    %1289 = vmatprep.subr.mxu0 0.0
    %1290 = vmatpush1.msra.mxu0 0.0
    %1291 = vmatprep.subr.mxu0 0.0
    %1292 = vmatpush1.msra.mxu0 0.0
    %1293 = vmatprep.subr.mxu0 0.0
    %1294 = vmatpush1.msra.mxu0 0.0
    %1295 = vmatprep.subr.mxu0 0.0
    %1296 = vmatpush1.msra.mxu0 0.0
    %1297 = vmatprep.subr.mxu0 0.0
    %1298 = vmatpush1.msra.mxu0 0.0
    %1299 = vmatprep.subr.mxu0 0.0
    %1300 = vmatpush1.msra.mxu0 0.0
    %1301 = vmatprep.subr.mxu0 0.0
    %1302 = vmatpush1.msra.mxu0 0.0
    %1303 = vmatprep.subr.mxu0 0.0
    %1304 = vmatpush1.msra.mxu0 0.0
    %1305 = vmatprep.subr.mxu0 0.0
    %1306 = vmatpush1.msra.mxu0 0.0
    %1307 = vmatprep.subr.mxu0 0.0
    %1308 = vmatpush1.msra.mxu0 0.0
    %1309 = vmatprep.subr.mxu0 0.0
    %1310 = vmatpush1.msra.mxu0 0.0
    %1311 = vmatprep.subr.mxu0 0.0
    %1312 = vmatpush1.msra.mxu0 0.0
    %1313 = vmatprep.subr.mxu0 0.0
    %1314 = vmatpush1.msra.mxu0 0.0
    %1315 = vmatprep.subr.mxu0 0.0
    %1316 = vmatpush1.msra.mxu0 0.0
    %1317 = vmatprep.subr.mxu0 0.0
    %1318 = vmatpush1.msra.mxu0 0.0
    %1319 = vmatprep.subr.mxu0 0.0
    %1320 = vmatpush1.msra.mxu0 0.0
    %1321 = vmatprep.subr.mxu0 0.0
    %1322 = vmatpush1.msra.mxu0 0.0
    %1323 = vmatprep.subr.mxu0 0.0
    %1324 = vmatpush1.msra.mxu0 0.0
    %1325 = vmatprep.subr.mxu0 0.0
    %1326 = vmatpush1.msra.mxu0 0.0
    %1327 = vmatprep.subr.mxu0 0.0
    %1328 = vmatpush1.msra.mxu0 0.0
    %1329 = vmatprep.subr.mxu0 0.0
    %1330 = vmatpush1.msra.mxu0 0.0
    %1331 = vmatprep.subr.mxu0 0.0
    %1332 = vmatpush1.msra.mxu0 0.0
    %1333 = vmatprep.mubr.f32.mxu0 0.0
    %v1334 = vand.u32 %v935, 4294901760
    %v1335 = vsub.f32 %v935, %v1334
    %v1336 = vand.u32 %v1335, 4294901760
    %1337 = vmatmul.mubr.f32.gmra.mrb[0].mxu0 %v1336
    %v1338 = vpop.f32.mrb[0].mxu0
    %v1339 = vadd.f32 %v1241, %v1338
    %v1340 = vpop.f32.mrb[0].mxu0
    %1341 = vmatprep.mubr.f32.mxu0 0.0
    %v1342 = vand.u32 %v938, 4294901760
    %v1343 = vsub.f32 %v938, %v1342
    %v1344 = vand.u32 %v1343, 4294901760
    %1345 = vmatmul.mubr.f32.gmra.mrb[0].mxu0 %v1344
    %v1346 = vpop.f32.mrb[0].mxu0
    %v1347 = vadd.f32 %v1248, %v1346
    %v1348 = vpop.f32.mrb[0].mxu0
    %1349 = vmatprep.mubr.f32.mxu0 0.0
    %v1350 = vand.u32 %v941, 4294901760
    %v1351 = vsub.f32 %v941, %v1350
    %v1352 = vand.u32 %v1351, 4294901760
    %1353 = vmatmul.mubr.f32.gmra.mrb[0].mxu0 %v1352
    %v1354 = vpop.f32.mrb[0].mxu0
    %v1355 = vadd.f32 %v1255, %v1354
    %v1356 = vpop.f32.mrb[0].mxu0
    %1357 = vmatprep.mubr.f32.mxu0 0.0
    %v1358 = vand.u32 %v944, 4294901760
    %v1359 = vsub.f32 %v944, %v1358
    %v1360 = vand.u32 %v1359, 4294901760
    %1361 = vmatmul.mubr.f32.gmra.mrb[0].mxu0 %v1360
    %v1362 = vpop.f32.mrb[0].mxu0
    %v1363 = vadd.f32 %v1262, %v1362
    %v1364 = vpop.f32.mrb[0].mxu0
    %1365 = vdwg.mxu0
    %1366 = vmatprep.subr.mxu0 0.0
    %v1367 = vand.u32 %v910, 4294901760
    %v1368 = vsub.f32 %v910, %v1367
    %v1369 = vand.u32 %v1368, 4294901760
    %1370 = vmatpush1.msra.mxu0 %v1369
    %1371 = vmatprep.subr.mxu0 0.0
    %v1372 = vand.u32 %v911, 4294901760
    %v1373 = vsub.f32 %v911, %v1372
    %v1374 = vand.u32 %v1373, 4294901760
    %1375 = vmatpush1.msra.mxu0 %v1374
    %1376 = vmatprep.subr.mxu0 0.0
    %v1377 = vand.u32 %v912, 4294901760
    %v1378 = vsub.f32 %v912, %v1377
    %v1379 = vand.u32 %v1378, 4294901760
    %1380 = vmatpush1.msra.mxu0 %v1379
    %1381 = vmatprep.subr.mxu0 0.0
    %v1382 = vand.u32 %v913, 4294901760
    %v1383 = vsub.f32 %v913, %v1382
    %v1384 = vand.u32 %v1383, 4294901760
    %1385 = vmatpush1.msra.mxu0 %v1384
    %1386 = vmatprep.subr.mxu0 0.0
    %1387 = vmatpush1.msra.mxu0 0.0
    %1388 = vmatprep.subr.mxu0 0.0
    %1389 = vmatpush1.msra.mxu0 0.0
    %1390 = vmatprep.subr.mxu0 0.0
    %1391 = vmatpush1.msra.mxu0 0.0
    %1392 = vmatprep.subr.mxu0 0.0
    %1393 = vmatpush1.msra.mxu0 0.0
    %1394 = vmatprep.subr.mxu0 0.0
    %1395 = vmatpush1.msra.mxu0 0.0
    %1396 = vmatprep.subr.mxu0 0.0
    %1397 = vmatpush1.msra.mxu0 0.0
    %1398 = vmatprep.subr.mxu0 0.0
    %1399 = vmatpush1.msra.mxu0 0.0
    %1400 = vmatprep.subr.mxu0 0.0
    %1401 = vmatpush1.msra.mxu0 0.0
    %1402 = vmatprep.subr.mxu0 0.0
    %1403 = vmatpush1.msra.mxu0 0.0
    %1404 = vmatprep.subr.mxu0 0.0
    %1405 = vmatpush1.msra.mxu0 0.0
    %1406 = vmatprep.subr.mxu0 0.0
    %1407 = vmatpush1.msra.mxu0 0.0
    %1408 = vmatprep.subr.mxu0 0.0
    %1409 = vmatpush1.msra.mxu0 0.0
    %1410 = vmatprep.subr.mxu0 0.0
    %1411 = vmatpush1.msra.mxu0 0.0
    %1412 = vmatprep.subr.mxu0 0.0
    %1413 = vmatpush1.msra.mxu0 0.0
    %1414 = vmatprep.subr.mxu0 0.0
    %1415 = vmatpush1.msra.mxu0 0.0
    %1416 = vmatprep.subr.mxu0 0.0
    %1417 = vmatpush1.msra.mxu0 0.0
    %1418 = vmatprep.subr.mxu0 0.0
    %1419 = vmatpush1.msra.mxu0 0.0
    %1420 = vmatprep.subr.mxu0 0.0
    %1421 = vmatpush1.msra.mxu0 0.0
    %1422 = vmatprep.subr.mxu0 0.0
    %1423 = vmatpush1.msra.mxu0 0.0
    %1424 = vmatprep.subr.mxu0 0.0
    %1425 = vmatpush1.msra.mxu0 0.0
    %1426 = vmatprep.subr.mxu0 0.0
    %1427 = vmatpush1.msra.mxu0 0.0
    %1428 = vmatprep.subr.mxu0 0.0
    %1429 = vmatpush1.msra.mxu0 0.0
    %1430 = vmatprep.subr.mxu0 0.0
    %1431 = vmatpush1.msra.mxu0 0.0
    %1432 = vmatprep.subr.mxu0 0.0
    %1433 = vmatpush1.msra.mxu0 0.0
    %1434 = vmatprep.subr.mxu0 0.0
    %1435 = vmatpush1.msra.mxu0 0.0
    %1436 = vmatprep.subr.mxu0 0.0
    %1437 = vmatpush1.msra.mxu0 0.0
    %1438 = vmatprep.subr.mxu0 0.0
    %1439 = vmatpush1.msra.mxu0 0.0
    %1440 = vmatprep.subr.mxu0 0.0
    %1441 = vmatpush1.msra.mxu0 0.0
    %1442 = vmatprep.mubr.f32.mxu0 0.0
    %v1443 = vand.u32 %v935, 4294901760
    %1444 = vmatmul.mubr.f32.gmra.mrb[0].mxu0 %v1443
    %v1445 = vpop.f32.mrb[0].mxu0
    %v1446 = vadd.f32 %v1339, %v1445
    %v1447 = vpop.f32.mrb[0].mxu0
    %1448 = vmatprep.mubr.f32.mxu0 0.0
    %v1449 = vand.u32 %v938, 4294901760
    %1450 = vmatmul.mubr.f32.gmra.mrb[0].mxu0 %v1449
    %v1451 = vpop.f32.mrb[0].mxu0
    %v1452 = vadd.f32 %v1347, %v1451
    %v1453 = vpop.f32.mrb[0].mxu0
    %1454 = vmatprep.mubr.f32.mxu0 0.0
    %v1455 = vand.u32 %v941, 4294901760
    %1456 = vmatmul.mubr.f32.gmra.mrb[0].mxu0 %v1455
    %v1457 = vpop.f32.mrb[0].mxu0
    %v1458 = vadd.f32 %v1355, %v1457
    %v1459 = vpop.f32.mrb[0].mxu0
    %1460 = vmatprep.mubr.f32.mxu0 0.0
    %v1461 = vand.u32 %v944, 4294901760
    %1462 = vmatmul.mubr.f32.gmra.mrb[0].mxu0 %v1461
    %v1463 = vpop.f32.mrb[0].mxu0
    %v1464 = vadd.f32 %v1363, %v1463
    %v1465 = vpop.f32.mrb[0].mxu0
    %1466 = vdwg.mxu0
    %1467 = vmatprep.subr.mxu0 0.0
    %v1468 = vand.u32 %v910, 4294901760
    %1469 = vmatpush1.msra.mxu0 %v1468
    %1470 = vmatprep.subr.mxu0 0.0
    %v1471 = vand.u32 %v911, 4294901760
    %1472 = vmatpush1.msra.mxu0 %v1471
    %1473 = vmatprep.subr.mxu0 0.0
    %v1474 = vand.u32 %v912, 4294901760
    %1475 = vmatpush1.msra.mxu0 %v1474
    %1476 = vmatprep.subr.mxu0 0.0
    %v1477 = vand.u32 %v913, 4294901760
    %1478 = vmatpush1.msra.mxu0 %v1477
    %1479 = vmatprep.subr.mxu0 0.0
    %1480 = vmatpush1.msra.mxu0 0.0
    %1481 = vmatprep.subr.mxu0 0.0
    %1482 = vmatpush1.msra.mxu0 0.0
    %1483 = vmatprep.subr.mxu0 0.0
    %1484 = vmatpush1.msra.mxu0 0.0
    %1485 = vmatprep.subr.mxu0 0.0
    %1486 = vmatpush1.msra.mxu0 0.0
    %1487 = vmatprep.subr.mxu0 0.0
    %1488 = vmatpush1.msra.mxu0 0.0
    %1489 = vmatprep.subr.mxu0 0.0
    %1490 = vmatpush1.msra.mxu0 0.0
    %1491 = vmatprep.subr.mxu0 0.0
    %1492 = vmatpush1.msra.mxu0 0.0
    %1493 = vmatprep.subr.mxu0 0.0
    %1494 = vmatpush1.msra.mxu0 0.0
    %1495 = vmatprep.subr.mxu0 0.0
    %1496 = vmatpush1.msra.mxu0 0.0
    %1497 = vmatprep.subr.mxu0 0.0
    %1498 = vmatpush1.msra.mxu0 0.0
    %1499 = vmatprep.subr.mxu0 0.0
    %1500 = vmatpush1.msra.mxu0 0.0
    %1501 = vmatprep.subr.mxu0 0.0
    %1502 = vmatpush1.msra.mxu0 0.0
    %1503 = vmatprep.subr.mxu0 0.0
    %1504 = vmatpush1.msra.mxu0 0.0
    %1505 = vmatprep.subr.mxu0 0.0
    %1506 = vmatpush1.msra.mxu0 0.0
    %1507 = vmatprep.subr.mxu0 0.0
    %1508 = vmatpush1.msra.mxu0 0.0
    %1509 = vmatprep.subr.mxu0 0.0
    %1510 = vmatpush1.msra.mxu0 0.0
    %1511 = vmatprep.subr.mxu0 0.0
    %1512 = vmatpush1.msra.mxu0 0.0
    %1513 = vmatprep.subr.mxu0 0.0
    %1514 = vmatpush1.msra.mxu0 0.0
    %1515 = vmatprep.subr.mxu0 0.0
    %1516 = vmatpush1.msra.mxu0 0.0
    %1517 = vmatprep.subr.mxu0 0.0
    %1518 = vmatpush1.msra.mxu0 0.0
    %1519 = vmatprep.subr.mxu0 0.0
    %1520 = vmatpush1.msra.mxu0 0.0
    %1521 = vmatprep.subr.mxu0 0.0
    %1522 = vmatpush1.msra.mxu0 0.0
    %1523 = vmatprep.subr.mxu0 0.0
    %1524 = vmatpush1.msra.mxu0 0.0
    %1525 = vmatprep.subr.mxu0 0.0
    %1526 = vmatpush1.msra.mxu0 0.0
    %1527 = vmatprep.subr.mxu0 0.0
    %1528 = vmatpush1.msra.mxu0 0.0
    %1529 = vmatprep.subr.mxu0 0.0
    %1530 = vmatpush1.msra.mxu0 0.0
    %1531 = vmatprep.subr.mxu0 0.0
    %1532 = vmatpush1.msra.mxu0 0.0
    %1533 = vmatprep.subr.mxu0 0.0
    %1534 = vmatpush1.msra.mxu0 0.0
    %1535 = vmatprep.mubr.f32.mxu0 0.0
    %v1536 = vand.u32 %v935, 4294901760
    %1537 = vmatmul.mubr.f32.gmra.mrb[0].mxu0 %v1536
    %v1538 = vpop.f32.mrb[0].mxu0
    %v1539 = vadd.f32 %v1446, %v1538
    %v1540 = vpop.f32.mrb[0].mxu0
    %1541 = vmatprep.mubr.f32.mxu0 0.0
    %v1542 = vand.u32 %v938, 4294901760
    %1543 = vmatmul.mubr.f32.gmra.mrb[0].mxu0 %v1542
    %v1544 = vpop.f32.mrb[0].mxu0
    %v1545 = vadd.f32 %v1452, %v1544
    %v1546 = vpop.f32.mrb[0].mxu0
    %1547 = vmatprep.mubr.f32.mxu0 0.0
    %v1548 = vand.u32 %v941, 4294901760
    %1549 = vmatmul.mubr.f32.gmra.mrb[0].mxu0 %v1548
    %v1550 = vpop.f32.mrb[0].mxu0
    %v1551 = vadd.f32 %v1458, %v1550
    %v1552 = vpop.f32.mrb[0].mxu0
    %1553 = vmatprep.mubr.f32.mxu0 0.0
    %v1554 = vand.u32 %v944, 4294901760
    %1555 = vmatmul.mubr.f32.gmra.mrb[0].mxu0 %v1554
    %v1556 = vpop.f32.mrb[0].mxu0
    %v1557 = vadd.f32 %v1464, %v1556
    %v1558 = vpop.f32.mrb[0].mxu0
    %1559 = vdwg.mxu0
    %v1560 = vmax.f32 %v1539, 0.0
    %v1561 = vmax.f32 %v1545, 0.0
    %v1562 = vmax.f32 %v1551, 0.0
    %v1563 = vmax.f32 %v1557, 0.0
    %1565 = vset.pattern.permute.xlu0 0
    %1566 = vperm.xlu0 %1565, %v42
    %v1567 = vpop.permute.xlu0 %1566
    %v1569 = vlaneseq
    %v1570 = vshrl.u32 %v1569, 7
    %v1571 = vsub.s32 0, %v1570
    %v1572 = vrot.slane %v1567, %v1571
    %v1574 = vsel %vm79, %v41, 0
    %1576 = vmatprep.subr.mxu0 0.0
    %v1577 = vand.u32 %v1560, 4294901760
    %1578 = vmatpush1.msra.mxu0 %v1577
    %1579 = vmatprep.subr.mxu0 0.0
    %v1580 = vand.u32 %v1561, 4294901760
    %1581 = vmatpush1.msra.mxu0 %v1580
    %1582 = vmatprep.subr.mxu0 0.0
    %v1583 = vand.u32 %v1562, 4294901760
    %1584 = vmatpush1.msra.mxu0 %v1583
    %1585 = vmatprep.subr.mxu0 0.0
    %v1586 = vand.u32 %v1563, 4294901760
    %1587 = vmatpush1.msra.mxu0 %v1586
    %1588 = vmatprep.subr.mxu0 0.0
    %1589 = vmatpush1.msra.mxu0 0.0
    %1590 = vmatprep.subr.mxu0 0.0
    %1591 = vmatpush1.msra.mxu0 0.0
    %1592 = vmatprep.subr.mxu0 0.0
    %1593 = vmatpush1.msra.mxu0 0.0
    %1594 = vmatprep.subr.mxu0 0.0
    %1595 = vmatpush1.msra.mxu0 0.0
    %1596 = vmatprep.subr.mxu0 0.0
    %1597 = vmatpush1.msra.mxu0 0.0
    %1598 = vmatprep.subr.mxu0 0.0
    %1599 = vmatpush1.msra.mxu0 0.0
    %1600 = vmatprep.subr.mxu0 0.0
    %1601 = vmatpush1.msra.mxu0 0.0
    %1602 = vmatprep.subr.mxu0 0.0
    %1603 = vmatpush1.msra.mxu0 0.0
    %1604 = vmatprep.subr.mxu0 0.0
    %1605 = vmatpush1.msra.mxu0 0.0
    %1606 = vmatprep.subr.mxu0 0.0
    %1607 = vmatpush1.msra.mxu0 0.0
    %1608 = vmatprep.subr.mxu0 0.0
    %1609 = vmatpush1.msra.mxu0 0.0
    %1610 = vmatprep.subr.mxu0 0.0
    %1611 = vmatpush1.msra.mxu0 0.0
    %1612 = vmatprep.subr.mxu0 0.0
    %1613 = vmatpush1.msra.mxu0 0.0
    %1614 = vmatprep.subr.mxu0 0.0
    %1615 = vmatpush1.msra.mxu0 0.0
    %1616 = vmatprep.subr.mxu0 0.0
    %1617 = vmatpush1.msra.mxu0 0.0
    %1618 = vmatprep.subr.mxu0 0.0
    %1619 = vmatpush1.msra.mxu0 0.0
    %1620 = vmatprep.subr.mxu0 0.0
    %1621 = vmatpush1.msra.mxu0 0.0
    %1622 = vmatprep.subr.mxu0 0.0
    %1623 = vmatpush1.msra.mxu0 0.0
    %1624 = vmatprep.subr.mxu0 0.0
    %1625 = vmatpush1.msra.mxu0 0.0
    %1626 = vmatprep.subr.mxu0 0.0
    %1627 = vmatpush1.msra.mxu0 0.0
    %1628 = vmatprep.subr.mxu0 0.0
    %1629 = vmatpush1.msra.mxu0 0.0
    %1630 = vmatprep.subr.mxu0 0.0
    %1631 = vmatpush1.msra.mxu0 0.0
    %1632 = vmatprep.subr.mxu0 0.0
    %1633 = vmatpush1.msra.mxu0 0.0
    %1634 = vmatprep.subr.mxu0 0.0
    %1635 = vmatpush1.msra.mxu0 0.0
    %1636 = vmatprep.subr.mxu0 0.0
    %1637 = vmatpush1.msra.mxu0 0.0
    %1638 = vmatprep.subr.mxu0 0.0
    %1639 = vmatpush1.msra.mxu0 0.0
    %1640 = vmatprep.subr.mxu0 0.0
    %1641 = vmatpush1.msra.mxu0 0.0
    %1642 = vmatprep.subr.mxu0 0.0
    %1643 = vmatpush1.msra.mxu0 0.0
    %1644 = vmatprep.mubr.f32.mxu0 0.0
    %v1645 = vand.u32 %v1574, 4294901760
    %v1646 = vsub.f32 %v1574, %v1645
    %v1647 = vand.u32 %v1646, 4294901760
    %v1648 = vsub.f32 %v1646, %v1647
    %v1649 = vand.u32 %v1648, 4294901760
    %1650 = vmatmul.mubr.f32.gmra.mrb[0].mxu0 %v1649
    %v1651 = vpop.f32.mrb[0].mxu0
    %v1652 = vadd.f32 %v1572, %v1651
    %v1653 = vpop.f32.mrb[0].mxu0
    %1654 = vdwg.mxu0
    %1655 = vmatprep.subr.mxu0 0.0
    %v1656 = vand.u32 %v1560, 4294901760
    %v1657 = vsub.f32 %v1560, %v1656
    %v1658 = vand.u32 %v1657, 4294901760
    %v1659 = vsub.f32 %v1657, %v1658
    %v1660 = vand.u32 %v1659, 4294901760
    %1661 = vmatpush1.msra.mxu0 %v1660
    %1662 = vmatprep.subr.mxu0 0.0
    %v1663 = vand.u32 %v1561, 4294901760
    %v1664 = vsub.f32 %v1561, %v1663
    %v1665 = vand.u32 %v1664, 4294901760
    %v1666 = vsub.f32 %v1664, %v1665
    %v1667 = vand.u32 %v1666, 4294901760
    %1668 = vmatpush1.msra.mxu0 %v1667
    %1669 = vmatprep.subr.mxu0 0.0
    %v1670 = vand.u32 %v1562, 4294901760
    %v1671 = vsub.f32 %v1562, %v1670
    %v1672 = vand.u32 %v1671, 4294901760
    %v1673 = vsub.f32 %v1671, %v1672
    %v1674 = vand.u32 %v1673, 4294901760
    %1675 = vmatpush1.msra.mxu0 %v1674
    %1676 = vmatprep.subr.mxu0 0.0
    %v1677 = vand.u32 %v1563, 4294901760
    %v1678 = vsub.f32 %v1563, %v1677
    %v1679 = vand.u32 %v1678, 4294901760
    %v1680 = vsub.f32 %v1678, %v1679
    %v1681 = vand.u32 %v1680, 4294901760
    %1682 = vmatpush1.msra.mxu0 %v1681
    %1683 = vmatprep.subr.mxu0 0.0
    %1684 = vmatpush1.msra.mxu0 0.0
    %1685 = vmatprep.subr.mxu0 0.0
    %1686 = vmatpush1.msra.mxu0 0.0
    %1687 = vmatprep.subr.mxu0 0.0
    %1688 = vmatpush1.msra.mxu0 0.0
    %1689 = vmatprep.subr.mxu0 0.0
    %1690 = vmatpush1.msra.mxu0 0.0
    %1691 = vmatprep.subr.mxu0 0.0
    %1692 = vmatpush1.msra.mxu0 0.0
    %1693 = vmatprep.subr.mxu0 0.0
    %1694 = vmatpush1.msra.mxu0 0.0
    %1695 = vmatprep.subr.mxu0 0.0
    %1696 = vmatpush1.msra.mxu0 0.0
    %1697 = vmatprep.subr.mxu0 0.0
    %1698 = vmatpush1.msra.mxu0 0.0
    %1699 = vmatprep.subr.mxu0 0.0
    %1700 = vmatpush1.msra.mxu0 0.0
    %1701 = vmatprep.subr.mxu0 0.0
    %1702 = vmatpush1.msra.mxu0 0.0
    %1703 = vmatprep.subr.mxu0 0.0
    %1704 = vmatpush1.msra.mxu0 0.0
    %1705 = vmatprep.subr.mxu0 0.0
    %1706 = vmatpush1.msra.mxu0 0.0
    %1707 = vmatprep.subr.mxu0 0.0
    %1708 = vmatpush1.msra.mxu0 0.0
    %1709 = vmatprep.subr.mxu0 0.0
    %1710 = vmatpush1.msra.mxu0 0.0
    %1711 = vmatprep.subr.mxu0 0.0
    %1712 = vmatpush1.msra.mxu0 0.0
    %1713 = vmatprep.subr.mxu0 0.0
    %1714 = vmatpush1.msra.mxu0 0.0
    %1715 = vmatprep.subr.mxu0 0.0
    %1716 = vmatpush1.msra.mxu0 0.0
    %1717 = vmatprep.subr.mxu0 0.0
    %1718 = vmatpush1.msra.mxu0 0.0
    %1719 = vmatprep.subr.mxu0 0.0
    %1720 = vmatpush1.msra.mxu0 0.0
    %1721 = vmatprep.subr.mxu0 0.0
    %1722 = vmatpush1.msra.mxu0 0.0
    %1723 = vmatprep.subr.mxu0 0.0
    %1724 = vmatpush1.msra.mxu0 0.0
    %1725 = vmatprep.subr.mxu0 0.0
    %1726 = vmatpush1.msra.mxu0 0.0
    %1727 = vmatprep.subr.mxu0 0.0
    %1728 = vmatpush1.msra.mxu0 0.0
    %1729 = vmatprep.subr.mxu0 0.0
    %1730 = vmatpush1.msra.mxu0 0.0
    %1731 = vmatprep.subr.mxu0 0.0
    %1732 = vmatpush1.msra.mxu0 0.0
    %1733 = vmatprep.subr.mxu0 0.0
    %1734 = vmatpush1.msra.mxu0 0.0
    %1735 = vmatprep.subr.mxu0 0.0
    %1736 = vmatpush1.msra.mxu0 0.0
    %1737 = vmatprep.subr.mxu0 0.0
    %1738 = vmatpush1.msra.mxu0 0.0
    %1739 = vmatprep.mubr.f32.mxu0 0.0
    %v1740 = vand.u32 %v1574, 4294901760
    %1741 = vmatmul.mubr.f32.gmra.mrb[0].mxu0 %v1740
    %v1742 = vpop.f32.mrb[0].mxu0
    %v1743 = vadd.f32 %v1652, %v1742
    %v1744 = vpop.f32.mrb[0].mxu0
    %1745 = vdwg.mxu0
    %1746 = vmatprep.subr.mxu0 0.0
    %v1747 = vand.u32 %v1560, 4294901760
    %v1748 = vsub.f32 %v1560, %v1747
    %1749 = vmatpush1.msra.mxu0 %v1748
    %1750 = vmatprep.subr.mxu0 0.0
    %v1751 = vand.u32 %v1561, 4294901760
    %v1752 = vsub.f32 %v1561, %v1751
    %1753 = vmatpush1.msra.mxu0 %v1752
    %1754 = vmatprep.subr.mxu0 0.0
    %v1755 = vand.u32 %v1562, 4294901760
    %v1756 = vsub.f32 %v1562, %v1755
    %1757 = vmatpush1.msra.mxu0 %v1756
    %1758 = vmatprep.subr.mxu0 0.0
    %v1759 = vand.u32 %v1563, 4294901760
    %v1760 = vsub.f32 %v1563, %v1759
    %1761 = vmatpush1.msra.mxu0 %v1760
    %1762 = vmatprep.subr.mxu0 0.0
    %1763 = vmatpush1.msra.mxu0 0.0
    %1764 = vmatprep.subr.mxu0 0.0
    %1765 = vmatpush1.msra.mxu0 0.0
    %1766 = vmatprep.subr.mxu0 0.0
    %1767 = vmatpush1.msra.mxu0 0.0
    %1768 = vmatprep.subr.mxu0 0.0
    %1769 = vmatpush1.msra.mxu0 0.0
    %1770 = vmatprep.subr.mxu0 0.0
    %1771 = vmatpush1.msra.mxu0 0.0
    %1772 = vmatprep.subr.mxu0 0.0
    %1773 = vmatpush1.msra.mxu0 0.0
    %1774 = vmatprep.subr.mxu0 0.0
    %1775 = vmatpush1.msra.mxu0 0.0
    %1776 = vmatprep.subr.mxu0 0.0
    %1777 = vmatpush1.msra.mxu0 0.0
    %1778 = vmatprep.subr.mxu0 0.0
    %1779 = vmatpush1.msra.mxu0 0.0
    %1780 = vmatprep.subr.mxu0 0.0
    %1781 = vmatpush1.msra.mxu0 0.0
    %1782 = vmatprep.subr.mxu0 0.0
    %1783 = vmatpush1.msra.mxu0 0.0
    %1784 = vmatprep.subr.mxu0 0.0
    %1785 = vmatpush1.msra.mxu0 0.0
    %1786 = vmatprep.subr.mxu0 0.0
    %1787 = vmatpush1.msra.mxu0 0.0
    %1788 = vmatprep.subr.mxu0 0.0
    %1789 = vmatpush1.msra.mxu0 0.0
    %1790 = vmatprep.subr.mxu0 0.0
    %1791 = vmatpush1.msra.mxu0 0.0
    %1792 = vmatprep.subr.mxu0 0.0
    %1793 = vmatpush1.msra.mxu0 0.0
    %1794 = vmatprep.subr.mxu0 0.0
    %1795 = vmatpush1.msra.mxu0 0.0
    %1796 = vmatprep.subr.mxu0 0.0
    %1797 = vmatpush1.msra.mxu0 0.0
    %1798 = vmatprep.subr.mxu0 0.0
    %1799 = vmatpush1.msra.mxu0 0.0
    %1800 = vmatprep.subr.mxu0 0.0
    %1801 = vmatpush1.msra.mxu0 0.0
    %1802 = vmatprep.subr.mxu0 0.0
    %1803 = vmatpush1.msra.mxu0 0.0
    %1804 = vmatprep.subr.mxu0 0.0
    %1805 = vmatpush1.msra.mxu0 0.0
    %1806 = vmatprep.subr.mxu0 0.0
    %1807 = vmatpush1.msra.mxu0 0.0
    %1808 = vmatprep.subr.mxu0 0.0
    %1809 = vmatpush1.msra.mxu0 0.0
    %1810 = vmatprep.subr.mxu0 0.0
    %1811 = vmatpush1.msra.mxu0 0.0
    %1812 = vmatprep.subr.mxu0 0.0
    %1813 = vmatpush1.msra.mxu0 0.0
    %1814 = vmatprep.subr.mxu0 0.0
    %1815 = vmatpush1.msra.mxu0 0.0
    %1816 = vmatprep.subr.mxu0 0.0
    %1817 = vmatpush1.msra.mxu0 0.0
    %1818 = vmatprep.mubr.f32.mxu0 0.0
    %v1819 = vand.u32 %v1574, 4294901760
    %v1820 = vsub.f32 %v1574, %v1819
    %1821 = vmatmul.mubr.f32.gmra.mrb[0].mxu0 %v1820
    %v1822 = vpop.f32.mrb[0].mxu0
    %v1823 = vadd.f32 %v1743, %v1822
    %v1824 = vpop.f32.mrb[0].mxu0
    %1825 = vdwg.mxu0
    %1826 = vmatprep.subr.mxu0 0.0
    %v1827 = vand.u32 %v1560, 4294901760
    %1828 = vmatpush1.msra.mxu0 %v1827
    %1829 = vmatprep.subr.mxu0 0.0
    %v1830 = vand.u32 %v1561, 4294901760
    %1831 = vmatpush1.msra.mxu0 %v1830
    %1832 = vmatprep.subr.mxu0 0.0
    %v1833 = vand.u32 %v1562, 4294901760
    %1834 = vmatpush1.msra.mxu0 %v1833
    %1835 = vmatprep.subr.mxu0 0.0
    %v1836 = vand.u32 %v1563, 4294901760
    %1837 = vmatpush1.msra.mxu0 %v1836
    %1838 = vmatprep.subr.mxu0 0.0
    %1839 = vmatpush1.msra.mxu0 0.0
    %1840 = vmatprep.subr.mxu0 0.0
    %1841 = vmatpush1.msra.mxu0 0.0
    %1842 = vmatprep.subr.mxu0 0.0
    %1843 = vmatpush1.msra.mxu0 0.0
    %1844 = vmatprep.subr.mxu0 0.0
    %1845 = vmatpush1.msra.mxu0 0.0
    %1846 = vmatprep.subr.mxu0 0.0
    %1847 = vmatpush1.msra.mxu0 0.0
    %1848 = vmatprep.subr.mxu0 0.0
    %1849 = vmatpush1.msra.mxu0 0.0
    %1850 = vmatprep.subr.mxu0 0.0
    %1851 = vmatpush1.msra.mxu0 0.0
    %1852 = vmatprep.subr.mxu0 0.0
    %1853 = vmatpush1.msra.mxu0 0.0
    %1854 = vmatprep.subr.mxu0 0.0
    %1855 = vmatpush1.msra.mxu0 0.0
    %1856 = vmatprep.subr.mxu0 0.0
    %1857 = vmatpush1.msra.mxu0 0.0
    %1858 = vmatprep.subr.mxu0 0.0
    %1859 = vmatpush1.msra.mxu0 0.0
    %1860 = vmatprep.subr.mxu0 0.0
    %1861 = vmatpush1.msra.mxu0 0.0
    %1862 = vmatprep.subr.mxu0 0.0
    %1863 = vmatpush1.msra.mxu0 0.0
    %1864 = vmatprep.subr.mxu0 0.0
    %1865 = vmatpush1.msra.mxu0 0.0
    %1866 = vmatprep.subr.mxu0 0.0
    %1867 = vmatpush1.msra.mxu0 0.0
    %1868 = vmatprep.subr.mxu0 0.0
    %1869 = vmatpush1.msra.mxu0 0.0
    %1870 = vmatprep.subr.mxu0 0.0
    %1871 = vmatpush1.msra.mxu0 0.0
    %1872 = vmatprep.subr.mxu0 0.0
    %1873 = vmatpush1.msra.mxu0 0.0
    %1874 = vmatprep.subr.mxu0 0.0
    %1875 = vmatpush1.msra.mxu0 0.0
    %1876 = vmatprep.subr.mxu0 0.0
    %1877 = vmatpush1.msra.mxu0 0.0
    %1878 = vmatprep.subr.mxu0 0.0
    %1879 = vmatpush1.msra.mxu0 0.0
    %1880 = vmatprep.subr.mxu0 0.0
    %1881 = vmatpush1.msra.mxu0 0.0
    %1882 = vmatprep.subr.mxu0 0.0
    %1883 = vmatpush1.msra.mxu0 0.0
    %1884 = vmatprep.subr.mxu0 0.0
    %1885 = vmatpush1.msra.mxu0 0.0
    %1886 = vmatprep.subr.mxu0 0.0
    %1887 = vmatpush1.msra.mxu0 0.0
    %1888 = vmatprep.subr.mxu0 0.0
    %1889 = vmatpush1.msra.mxu0 0.0
    %1890 = vmatprep.subr.mxu0 0.0
    %1891 = vmatpush1.msra.mxu0 0.0
    %1892 = vmatprep.subr.mxu0 0.0
    %1893 = vmatpush1.msra.mxu0 0.0
    %1894 = vmatprep.mubr.f32.mxu0 0.0
    %v1895 = vand.u32 %v1574, 4294901760
    %v1896 = vsub.f32 %v1574, %v1895
    %v1897 = vand.u32 %v1896, 4294901760
    %1898 = vmatmul.mubr.f32.gmra.mrb[0].mxu0 %v1897
    %v1899 = vpop.f32.mrb[0].mxu0
    %v1900 = vadd.f32 %v1823, %v1899
    %v1901 = vpop.f32.mrb[0].mxu0
    %1902 = vdwg.mxu0
    %1903 = vmatprep.subr.mxu0 0.0
    %v1904 = vand.u32 %v1560, 4294901760
    %v1905 = vsub.f32 %v1560, %v1904
    %v1906 = vand.u32 %v1905, 4294901760
    %1907 = vmatpush1.msra.mxu0 %v1906
    %1908 = vmatprep.subr.mxu0 0.0
    %v1909 = vand.u32 %v1561, 4294901760
    %v1910 = vsub.f32 %v1561, %v1909
    %v1911 = vand.u32 %v1910, 4294901760
    %1912 = vmatpush1.msra.mxu0 %v1911
    %1913 = vmatprep.subr.mxu0 0.0
    %v1914 = vand.u32 %v1562, 4294901760
    %v1915 = vsub.f32 %v1562, %v1914
    %v1916 = vand.u32 %v1915, 4294901760
    %1917 = vmatpush1.msra.mxu0 %v1916
    %1918 = vmatprep.subr.mxu0 0.0
    %v1919 = vand.u32 %v1563, 4294901760
    %v1920 = vsub.f32 %v1563, %v1919
    %v1921 = vand.u32 %v1920, 4294901760
    %1922 = vmatpush1.msra.mxu0 %v1921
    %1923 = vmatprep.subr.mxu0 0.0
    %1924 = vmatpush1.msra.mxu0 0.0
    %1925 = vmatprep.subr.mxu0 0.0
    %1926 = vmatpush1.msra.mxu0 0.0
    %1927 = vmatprep.subr.mxu0 0.0
    %1928 = vmatpush1.msra.mxu0 0.0
    %1929 = vmatprep.subr.mxu0 0.0
    %1930 = vmatpush1.msra.mxu0 0.0
    %1931 = vmatprep.subr.mxu0 0.0
    %1932 = vmatpush1.msra.mxu0 0.0
    %1933 = vmatprep.subr.mxu0 0.0
    %1934 = vmatpush1.msra.mxu0 0.0
    %1935 = vmatprep.subr.mxu0 0.0
    %1936 = vmatpush1.msra.mxu0 0.0
    %1937 = vmatprep.subr.mxu0 0.0
    %1938 = vmatpush1.msra.mxu0 0.0
    %1939 = vmatprep.subr.mxu0 0.0
    %1940 = vmatpush1.msra.mxu0 0.0
    %1941 = vmatprep.subr.mxu0 0.0
    %1942 = vmatpush1.msra.mxu0 0.0
    %1943 = vmatprep.subr.mxu0 0.0
    %1944 = vmatpush1.msra.mxu0 0.0
    %1945 = vmatprep.subr.mxu0 0.0
    %1946 = vmatpush1.msra.mxu0 0.0
    %1947 = vmatprep.subr.mxu0 0.0
    %1948 = vmatpush1.msra.mxu0 0.0
    %1949 = vmatprep.subr.mxu0 0.0
    %1950 = vmatpush1.msra.mxu0 0.0
    %1951 = vmatprep.subr.mxu0 0.0
    %1952 = vmatpush1.msra.mxu0 0.0
    %1953 = vmatprep.subr.mxu0 0.0
    %1954 = vmatpush1.msra.mxu0 0.0
    %1955 = vmatprep.subr.mxu0 0.0
    %1956 = vmatpush1.msra.mxu0 0.0
    %1957 = vmatprep.subr.mxu0 0.0
    %1958 = vmatpush1.msra.mxu0 0.0
    %1959 = vmatprep.subr.mxu0 0.0
    %1960 = vmatpush1.msra.mxu0 0.0
    %1961 = vmatprep.subr.mxu0 0.0
    %1962 = vmatpush1.msra.mxu0 0.0
    %1963 = vmatprep.subr.mxu0 0.0
    %1964 = vmatpush1.msra.mxu0 0.0
    %1965 = vmatprep.subr.mxu0 0.0
    %1966 = vmatpush1.msra.mxu0 0.0
    %1967 = vmatprep.subr.mxu0 0.0
    %1968 = vmatpush1.msra.mxu0 0.0
    %1969 = vmatprep.subr.mxu0 0.0
    %1970 = vmatpush1.msra.mxu0 0.0
    %1971 = vmatprep.subr.mxu0 0.0
    %1972 = vmatpush1.msra.mxu0 0.0
    %1973 = vmatprep.subr.mxu0 0.0
    %1974 = vmatpush1.msra.mxu0 0.0
    %1975 = vmatprep.subr.mxu0 0.0
    %1976 = vmatpush1.msra.mxu0 0.0
    %1977 = vmatprep.subr.mxu0 0.0
    %1978 = vmatpush1.msra.mxu0 0.0
    %1979 = vmatprep.mubr.f32.mxu0 0.0
    %v1980 = vand.u32 %v1574, 4294901760
    %1981 = vmatmul.mubr.f32.gmra.mrb[0].mxu0 %v1980
    %v1982 = vpop.f32.mrb[0].mxu0
    %v1983 = vadd.f32 %v1900, %v1982
    %v1984 = vpop.f32.mrb[0].mxu0
    %1985 = vdwg.mxu0
    %1986 = vmatprep.subr.mxu0 0.0
    %v1987 = vand.u32 %v1560, 4294901760
    %1988 = vmatpush1.msra.mxu0 %v1987
    %1989 = vmatprep.subr.mxu0 0.0
    %v1990 = vand.u32 %v1561, 4294901760
    %1991 = vmatpush1.msra.mxu0 %v1990
    %1992 = vmatprep.subr.mxu0 0.0
    %v1993 = vand.u32 %v1562, 4294901760
    %1994 = vmatpush1.msra.mxu0 %v1993
    %1995 = vmatprep.subr.mxu0 0.0
    %v1996 = vand.u32 %v1563, 4294901760
    %1997 = vmatpush1.msra.mxu0 %v1996
    %1998 = vmatprep.subr.mxu0 0.0
    %1999 = vmatpush1.msra.mxu0 0.0
    %2000 = vmatprep.subr.mxu0 0.0
    %2001 = vmatpush1.msra.mxu0 0.0
    %2002 = vmatprep.subr.mxu0 0.0
    %2003 = vmatpush1.msra.mxu0 0.0
    %2004 = vmatprep.subr.mxu0 0.0
    %2005 = vmatpush1.msra.mxu0 0.0
    %2006 = vmatprep.subr.mxu0 0.0
    %2007 = vmatpush1.msra.mxu0 0.0
    %2008 = vmatprep.subr.mxu0 0.0
    %2009 = vmatpush1.msra.mxu0 0.0
    %2010 = vmatprep.subr.mxu0 0.0
    %2011 = vmatpush1.msra.mxu0 0.0
    %2012 = vmatprep.subr.mxu0 0.0
    %2013 = vmatpush1.msra.mxu0 0.0
    %2014 = vmatprep.subr.mxu0 0.0
    %2015 = vmatpush1.msra.mxu0 0.0
    %2016 = vmatprep.subr.mxu0 0.0
    %2017 = vmatpush1.msra.mxu0 0.0
    %2018 = vmatprep.subr.mxu0 0.0
    %2019 = vmatpush1.msra.mxu0 0.0
    %2020 = vmatprep.subr.mxu0 0.0
    %2021 = vmatpush1.msra.mxu0 0.0
    %2022 = vmatprep.subr.mxu0 0.0
    %2023 = vmatpush1.msra.mxu0 0.0
    %2024 = vmatprep.subr.mxu0 0.0
    %2025 = vmatpush1.msra.mxu0 0.0
    %2026 = vmatprep.subr.mxu0 0.0
    %2027 = vmatpush1.msra.mxu0 0.0
    %2028 = vmatprep.subr.mxu0 0.0
    %2029 = vmatpush1.msra.mxu0 0.0
    %2030 = vmatprep.subr.mxu0 0.0
    %2031 = vmatpush1.msra.mxu0 0.0
    %2032 = vmatprep.subr.mxu0 0.0
    %2033 = vmatpush1.msra.mxu0 0.0
    %2034 = vmatprep.subr.mxu0 0.0
    %2035 = vmatpush1.msra.mxu0 0.0
    %2036 = vmatprep.subr.mxu0 0.0
    %2037 = vmatpush1.msra.mxu0 0.0
    %2038 = vmatprep.subr.mxu0 0.0
    %2039 = vmatpush1.msra.mxu0 0.0
    %2040 = vmatprep.subr.mxu0 0.0
    %2041 = vmatpush1.msra.mxu0 0.0
    %2042 = vmatprep.subr.mxu0 0.0
    %2043 = vmatpush1.msra.mxu0 0.0
    %2044 = vmatprep.subr.mxu0 0.0
    %2045 = vmatpush1.msra.mxu0 0.0
    %2046 = vmatprep.subr.mxu0 0.0
    %2047 = vmatpush1.msra.mxu0 0.0
    %2048 = vmatprep.subr.mxu0 0.0
    %2049 = vmatpush1.msra.mxu0 0.0
    %2050 = vmatprep.subr.mxu0 0.0
    %2051 = vmatpush1.msra.mxu0 0.0
    %2052 = vmatprep.subr.mxu0 0.0
    %2053 = vmatpush1.msra.mxu0 0.0
    %2054 = vmatprep.mubr.f32.mxu0 0.0
    %v2055 = vand.u32 %v1574, 4294901760
    %2056 = vmatmul.mubr.f32.gmra.mrb[0].mxu0 %v2055
    %v2057 = vpop.f32.mrb[0].mxu0
    %v2058 = vadd.f32 %v1983, %v2057
    %v2059 = vpop.f32.mrb[0].mxu0
    %2060 = vdwg.mxu0
    %v2061 = vsub.f32 0.0, %v2058
    %v2062 = vmul.f32 %v2061, 1.442695
    %v2063 = vpow.pop %v2062
    %v2064 = vadd.f32 %v2063, 1.0
    %v2065 = vrcp.pop %v2064
    %v2066 = vmul.f32 1.0, %v2065
    %2067 = vst [vmem:[#allocation3] sm:$0x1] %v2066
    // Predicated region
    $region22: #{tpu_custom_call.1} parent=1 // pred_check
      _
    $region23: #{tpu_custom_call.1} parent=1 // pred_check_branch
      %2069 = sbr.rel (0) target = $region25
    $region24: #{tpu_custom_call.1} parent=1 // pred_region
      %s2071 = ssub.s32 16, 16
      %2072 = vsyncadd [#allocation4], %s2071
      %s2074 = sshll.u32 [#allocation3], 4
      %s2075 = int_to_ptr.vmem [resolvable:$true] %s2074
      %2077 = dma.vmem_to_hbm [thread:$0]  %s2075, 16, %s5, [#allocation4]
    $region25: #{tpu_custom_call.1} parent=1 // pred_fallthru
      _
    // Predicated region
    $region26: #{tpu_custom_call.1} parent=1 // pred_check
      _
    $region27: #{tpu_custom_call.1} parent=1 // pred_check_branch
      %2079 = sbr.rel (0) target = $region29
    $region28: #{tpu_custom_call.1} parent=1 // pred_region
      %2080 = dma.done [#allocation4], 16
    $region29: #{tpu_custom_call.1} parent=1 // pred_fallthru
      _
    %2081 = vsyncpa [#allocation4], 1

</llo_original>
